<compile_context>
chip_gen: v6e
topology: v6e:2x2x1
jax: 0.10.0
libtpu: 0.0.40
codegen_flags: <defaults>
</compile_context>

<pallas_src>
import functools

import jax
import jax.numpy as jnp
from jax.experimental import pallas as pl
from jax.experimental.pallas import tpu as pltpu


# ----------------------------------------------------------------------------
# Fused Pallas kernel: pre conv -> n_layers of WN -> proj -> sample
# ----------------------------------------------------------------------------
def fused_posterior_kernel(
    # scalar prefetch (SMEM)
    lens_ref,                       # (B,)   int32: valid lengths per batch element
    offs_ref,                       # (L, K) int32: tap start rows (used only when dilation > 1)
    # inputs (per grid step views)
    x_ref,                          # (T, Cin)   compute dtype
    eps_ref,                        # (T, Co)    f32 reparam noise
    w_pre_ref, b_pre_ref,           # (Cin, H), (1, H)
    w_in_t_ref, b_in_t_ref,         # (L, K*H, H), (L, 1, H)   tanh gate  (VMEM resident)
    w_in_s_ref, b_in_s_ref,         # (L, K*H, H), (L, 1, H)   sigmoid gate
    w_res_ref, b_res_ref,           # (L, H, H),   (L, 1, H)   residual 1x1 conv
    w_skip_ref, b_skip_ref,         # (L, H, H),   (L, 1, H)   skip 1x1 conv
    w_m_ref, b_m_ref,               # (H, Co), (1, Co)         proj (mean half)
    w_logs_ref, b_logs_ref,         # (H, Co), (1, Co)         proj (log-std half)
    # outputs
    out_ref,                        # (T, 3*Co)  packed [z | m | logs]
    # VMEM scratch (persistent across the layer grid axis)
    xpad_sc,                        # (pad_max + T + pad_max, H) compute dtype
    skip_sc,                        # (T, H) f32
    *, T, H, K, pad_max, static_taps, tau):
    b = pl.program_id(0)
    l = pl.program_id(1)
    n_layers = pl.num_programs(1)
    cdt = xpad_sc.dtype

    # Mask rebuilt in-kernel from the prefetched length (no lane-1 input block).
    length = lens_ref[b]
    mask = (jax.lax.broadcasted_iota(jnp.int32, (T, 1), 0) < length).astype(jnp.float32)

    # -------- layer 0: pre 1x1 conv (+ mask) into VMEM-resident hidden state
    @pl.when(l == 0)
    def _init():
        if pad_max > 0:  # zero only the halo strips; body rows are overwritten next
            xpad_sc[0:pad_max, :] = jnp.zeros((pad_max, H), cdt)
            xpad_sc[T + pad_max:T + 2 * pad_max, :] = jnp.zeros((pad_max, H), cdt)
        h = (jnp.dot(x_ref[...], w_pre_ref[...],
                     preferred_element_type=jnp.float32) + b_pre_ref[...]) * mask
        xpad_sc[pad_max:pad_max + T, :] = h.astype(cdt)

    # -------- dilated conv: concat K shifted taps -> one wide-contraction matmul per gate
    if static_taps:
        # dilation_rate == 1: offsets are layer-independent Python constants (aligned static slices)
        taps = [xpad_sc[k:k + T, :] for k in range(K)]
    else:
        taps = [xpad_sc[pl.ds(offs_ref[l, k], T), :] for k in range(K)]
    xcat = taps[0] if K == 1 else jnp.concatenate(taps, axis=-1)        # (T, K*H) already in cdt

    pre_t = jnp.dot(xcat, w_in_t_ref[l], preferred_element_type=jnp.float32) + b_in_t_ref[l]
    pre_s = jnp.dot(xcat, w_in_s_ref[l], preferred_element_type=jnp.float32) + b_in_s_ref[l]
    acts = jnp.tanh(pre_t) * jax.nn.sigmoid(pre_s)                      # (T, H) f32
    acts_c = acts.astype(cdt)                                           # cast once for res+skip matmuls

    # -------- skip accumulation (f32, stays in VMEM; init-by-assignment at l == 0)
    skip_contrib = (jnp.dot(acts_c, w_skip_ref[l],
                            preferred_element_type=jnp.float32) + b_skip_ref[l])

    @pl.when(l == 0)
    def _skip_init():
        skip_sc[...] = skip_contrib

    @pl.when(l > 0)
    def _skip_acc():
        skip_sc[...] = skip_sc[...] + skip_contrib

    # -------- residual update (all layers except the last), accumulate in f32
    @pl.when(l < n_layers - 1)
    def _residual():
        res = (jnp.dot(acts_c, w_res_ref[l],
                       preferred_element_type=jnp.float32) + b_res_ref[l])
        xcur = xpad_sc[pad_max:pad_max + T, :].astype(jnp.float32)
        xpad_sc[pad_max:pad_max + T, :] = ((xcur + res) * mask).astype(cdt)

    # -------- finalize: proj 1x1 conv + reparameterized sample, packed lane-dense output
    @pl.when(l == n_layers - 1)
    def _finalize():
        enc = skip_sc[...] * mask                                       # WN output, f32
        enc_c = enc.astype(cdt)
        m_v = (jnp.dot(enc_c, w_m_ref[...],
                       preferred_element_type=jnp.float32) + b_m_ref[...]) * mask
        lg_v = (jnp.dot(enc_c, w_logs_ref[...],
                        preferred_element_type=jnp.float32) + b_logs_ref[...]) * mask
        z_v = (m_v + eps_ref[...] * tau * jnp.exp(lg_v)) * mask
        out_ref[...] = jnp.concatenate([z_v, m_v, lg_v], axis=-1).astype(out_ref.dtype)


# ----------------------------------------------------------------------------
# Wrapper: one pallas_call for the whole forward pass
# ----------------------------------------------------------------------------
def posterior_encoder_forward(params, cfg, x_nct, x_lengths, eps_btc, tau=1.0,
                              compute_dtype=jnp.float32):
    """x_nct: (B, in_channels, T) PyTorch layout. Returns z, m, logs (B, C, T), mask (B, 1, T)."""
    B, Cin, T = x_nct.shape
    H = cfg["hidden_channels"]
    K = cfg["kernel_size"]
    DR = cfg["dilation_rate"]
    L = cfg["n_layers"]
    Co = cfg["out_channels"]
    cdt = compute_dtype
    itemsize = jnp.dtype(cdt).itemsize

    # Halo size for the largest dilation (DR == 1 in standard VITS); guard DR > 1 blowup.
    pad_max = (DR ** (L - 1)) * (K - 1) // 2
    hidden_scratch_bytes = (T + 2 * pad_max) * H * itemsize
    if hidden_scratch_bytes > 24 * 1024 * 1024:
        raise ValueError(
            f"padded hidden-state scratch is {hidden_scratch_bytes} bytes "
            f"(T={T}, pad_max={pad_max}, H={H}); dilation_rate>1 with many layers "
            "needs a T-chunked pipeline (not implemented).")

    static_taps = (DR == 1)
    # Per-layer tap start offsets (only consumed in-kernel when dilation_rate > 1).
    offs = jnp.array(
        [[pad_max - (DR ** l) * (K - 1) // 2 + k * (DR ** l) for k in range(K)]
         for l in range(L)], dtype=jnp.int32)
    lens_i32 = x_lengths.astype(jnp.int32)

    x_btc = jnp.transpose(x_nct, (0, 2, 1)).astype(cdt)                     # (B, T, Cin)
    mask_bt1 = (jnp.arange(T)[None, :] < x_lengths[:, None]).astype(jnp.float32)[..., None]

    wc = lambda w: w.astype(cdt)     # cast only matmul weights; biases stay f32
    weight_args = [
        wc(params["w_pre"]), params["b_pre"],
        wc(params["w_in_t"]), params["b_in_t"],
        wc(params["w_in_s"]), params["b_in_s"],
        wc(params["w_res"]), params["b_res"],
        wc(params["w_skip"]), params["b_skip"],
        wc(params["w_m"]), params["b_m"],
        wc(params["w_logs"]), params["b_logs"],
    ]

    # BlockSpec helpers; index_maps take (b, l, lens_ref, offs_ref) with 2 scalar-prefetch args.
    bt = lambda c: pl.BlockSpec((None, T, c), lambda b, l, lens, offs: (b, 0, 0))       # per-batch, layer-invariant
    res2 = lambda r, c: pl.BlockSpec((r, c), lambda b, l, lens, offs: (0, 0))           # resident 2-D weight
    res3 = lambda d0, r, c: pl.BlockSpec((d0, r, c), lambda b, l, lens, offs: (0, 0, 0))  # resident stacked weight

    grid_spec = pltpu.PrefetchScalarGridSpec(
        num_scalar_prefetch=2,
        grid=(B, L),                                   # batch parallel, layers arbitrary (innermost)
        in_specs=[
            bt(Cin),                                   # x
            bt(Co),                                    # eps
            res2(Cin, H), res2(1, H),                  # pre conv
            res3(L, K * H, H), res3(L, 1, H),          # in (tanh half)
            res3(L, K * H, H), res3(L, 1, H),          # in (sigmoid half)
            res3(L, H, H), res3(L, 1, H),              # res conv
            res3(L, H, H), res3(L, 1, H),              # skip conv
            res2(H, Co), res2(1, Co),                  # proj (m half)
            res2(H, Co), res2(1, Co),                  # proj (logs half)
        ],
        out_specs=bt(3 * Co),                          # packed [z | m | logs]
        scratch_shapes=[
            pltpu.VMEM((T + 2 * pad_max, H), cdt),     # padded hidden state (compute dtype)
            pltpu.VMEM((T, H), jnp.float32),           # skip accumulator (f32)
        ],
    )

    # VMEM budget: resident weights + double-buffered per-batch blocks + scratches + margin.
    weight_bytes = sum(int(a.size) * a.dtype.itemsize for a in weight_args)
    streamed_bytes = 2 * (T * Cin * itemsize + T * Co * 4 + T * 3 * Co * 4)
    scratch_bytes = hidden_scratch_bytes + T * H * 4
    vmem_est = 2 * weight_bytes + streamed_bytes + scratch_bytes + (4 << 20)
    vmem_limit = int(min(max(vmem_est, 32 << 20), 64 << 20))

    kern = functools.partial(fused_posterior_kernel, T=T, H=H, K=K,
                             pad_max=pad_max, static_taps=static_taps, tau=float(tau))

    # NOTE(v7x): with 2 TensorCores the only parallel axis is B — keep B even for balance.
    out = pl.pallas_call(
        kern,
        out_shape=jax.ShapeDtypeStruct((B, T, 3 * Co), jnp.float32),
        grid_spec=grid_spec,
        compiler_params=pltpu.CompilerParams(
            dimension_semantics=("parallel", "arbitrary"),
            vmem_limit_bytes=vmem_limit),
    )(lens_i32, offs,
      x_btc, eps_btc.astype(jnp.float32),
      *weight_args)

    z = out[..., 0 * Co:1 * Co]
    m = out[..., 1 * Co:2 * Co]
    logs = out[..., 2 * Co:3 * Co]
    to_nct = lambda a: jnp.transpose(a, (0, 2, 1))
    return to_nct(z), to_nct(m), to_nct(logs), to_nct(mask_bt1)   # mask -> (B, 1, T)


# ----------------------------------------------------------------------------
# Pure-JAX reference (same math / same parameterization) for verification
# ----------------------------------------------------------------------------
def reference_forward(params, cfg, x_nct, x_lengths, eps_btc, tau=1.0):
    B, Cin, T = x_nct.shape
    H, K, DR, L, Co = (cfg["hidden_channels"], cfg["kernel_size"],
                       cfg["dilation_rate"], cfg["n_layers"], cfg["out_channels"])
    x = jnp.transpose(x_nct, (0, 2, 1)).astype(jnp.float32)
    mask = (jnp.arange(T)[None, :] < x_lengths[:, None]).astype(jnp.float32)[..., None]

    h = (jnp.einsum("btc,cd->btd", x, params["w_pre"]) + params["b_pre"]) * mask
    xcur, skip = h, jnp.zeros_like(h)
    for l in range(L):
        dil = DR ** l
        pad = dil * (K - 1) // 2
        xpad = jnp.pad(xcur, ((0, 0), (pad, pad), (0, 0)))
        xcat = jnp.concatenate(
            [xpad[:, k * dil:k * dil + T, :] for k in range(K)], axis=-1)
        xt = jnp.einsum("btc,cd->btd", xcat, params["w_in_t"][l]) + params["b_in_t"][l]
        xs = jnp.einsum("btc,cd->btd", xcat, params["w_in_s"][l]) + params["b_in_s"][l]
        acts = jnp.tanh(xt) * jax.nn.sigmoid(xs)
        skip = skip + jnp.einsum("btc,cd->btd", acts, params["w_skip"][l]) + params["b_skip"][l]
        if l < L - 1:
            res = jnp.einsum("btc,cd->btd", acts, params["w_res"][l]) + params["b_res"][l]
            xcur = (xcur + res) * mask
    enc = skip * mask
    m = (jnp.einsum("btc,cd->btd", enc, params["w_m"]) + params["b_m"]) * mask
    logs = (jnp.einsum("btc,cd->btd", enc, params["w_logs"]) + params["b_logs"]) * mask
    z = (m + eps_btc * tau * jnp.exp(logs)) * mask
    to_nct = lambda a: jnp.transpose(a, (0, 2, 1))
    return to_nct(z), to_nct(m), to_nct(logs), to_nct(mask)


# ----------------------------------------------------------------------------
# Deterministic parameter init (split / stacked layout; last layer's res half unused,
# matching the PyTorch module where the last res_skip conv only outputs the skip half)
# ----------------------------------------------------------------------------
def init_params(key, cfg):
    Cin, Co, H, K, L = (cfg["in_channels"], cfg["out_channels"],
                        cfg["hidden_channels"], cfg["kernel_size"], cfg["n_layers"])
    ks = jax.random.split(key, 14)
    n = jax.random.normal
    return {
        "w_pre":  n(ks[0], (Cin, H), jnp.float32) * 0.1,
        "b_pre":  n(ks[1], (1, H), jnp.float32) * 0.01,
        "w_in_t": n(ks[2], (L, K * H, H), jnp.float32) * 0.05,   # rows ordered tap-major (k*H + c)
        "b_in_t": n(ks[3], (L, 1, H), jnp.float32) * 0.01,
        "w_in_s": n(ks[4], (L, K * H, H), jnp.float32) * 0.05,
        "b_in_s": n(ks[5], (L, 1, H), jnp.float32) * 0.01,
        "w_res":  n(ks[6], (L, H, H), jnp.float32) * 0.05,
        "b_res":  n(ks[7], (L, 1, H), jnp.float32) * 0.01,
        "w_skip": n(ks[8], (L, H, H), jnp.float32) * 0.05,
        "b_skip": n(ks[9], (L, 1, H), jnp.float32) * 0.01,
        "w_m":    n(ks[10], (H, Co), jnp.float32) * 0.1,
        "b_m":    n(ks[11], (1, Co), jnp.float32) * 0.01,
        "w_logs": n(ks[12], (H, Co), jnp.float32) * 0.1,
        "b_logs": n(ks[13], (1, Co), jnp.float32) * 0.01,
    }


# ----------------------------------------------------------------------------
# Main
# ----------------------------------------------------------------------------
if __name__ == "__main__":
    cfg = dict(in_channels=4, out_channels=4, hidden_channels=32,
               kernel_size=5, dilation_rate=1, n_layers=3, gin_channels=0)
    B, T = 2, 16
    tau = 1.0

    key = jax.random.PRNGKey(0)
    k_param, k_x, k_eps = jax.random.split(key, 3)

    params = init_params(k_param, cfg)
    x = jax.random.normal(k_x, (B, cfg["in_channels"], T), jnp.float32)        # (B, C, T) PyTorch layout
    x_lengths = jnp.array([16, 12], dtype=jnp.int32)
    eps = jax.random.normal(k_eps, (B, T, cfg["out_channels"]), jnp.float32)   # reparam noise

    z_r, m_r, logs_r, mask_r = reference_forward(params, cfg, x, x_lengths, eps, tau=tau)

    # f32 matmul path: tight check vs pure-JAX reference
    z, m, logs, x_mask = posterior_encoder_forward(
        params, cfg, x, x_lengths, eps, tau=tau, compute_dtype=jnp.float32)
    jax.block_until_ready((z, m, logs, x_mask))

    assert z.shape == (B, cfg["out_channels"], T)
    assert m.shape == (B, cfg["out_channels"], T)
    assert logs.shape == (B, cfg["out_channels"], T)
    assert x_mask.shape == (B, 1, T)
    for a, b_ in ((z, z_r), (m, m_r), (logs, logs_r), (x_mask, mask_r)):
        assert jnp.allclose(a, b_, atol=1e-4, rtol=1e-4), "Pallas (f32) mismatch vs reference"

    # bf16 matmul / hidden-state path (production setting): loose tolerance vs f32 reference
    z16, m16, logs16, _ = posterior_encoder_forward(
        params, cfg, x, x_lengths, eps, tau=tau, compute_dtype=jnp.bfloat16)
    jax.block_until_ready((z16, m16, logs16))
    for a, b_ in ((z16, z_r), (m16, m_r), (logs16, logs_r)):
        assert jnp.allclose(a, b_, atol=5e-2, rtol=5e-2), "Pallas (bf16) mismatch vs reference"

    print("KERNEL_OK")
</pallas_src>

<mosaic_0001>
module attributes {stable_mosaic.version = 11 : i64} {
  func.func @fused_posterior_kernel(%arg0: i32, %arg1: i32, %arg2: memref<2xi32, #tpu.memory_space<smem>>, %arg3: memref<3x5xi32, #tpu.memory_space<smem>>, %arg4: memref<1x16x4xf32, #tpu.memory_space<vmem>>, %arg5: memref<1x16x4xf32, #tpu.memory_space<vmem>>, %arg6: memref<4x32xf32, #tpu.memory_space<vmem>>, %arg7: memref<1x32xf32, #tpu.memory_space<vmem>>, %arg8: memref<3x160x32xf32, #tpu.memory_space<vmem>>, %arg9: memref<3x1x32xf32, #tpu.memory_space<vmem>>, %arg10: memref<3x160x32xf32, #tpu.memory_space<vmem>>, %arg11: memref<3x1x32xf32, #tpu.memory_space<vmem>>, %arg12: memref<3x32x32xf32, #tpu.memory_space<vmem>>, %arg13: memref<3x1x32xf32, #tpu.memory_space<vmem>>, %arg14: memref<3x32x32xf32, #tpu.memory_space<vmem>>, %arg15: memref<3x1x32xf32, #tpu.memory_space<vmem>>, %arg16: memref<32x4xf32, #tpu.memory_space<vmem>>, %arg17: memref<1x4xf32, #tpu.memory_space<vmem>>, %arg18: memref<32x4xf32, #tpu.memory_space<vmem>>, %arg19: memref<1x4xf32, #tpu.memory_space<vmem>>, %arg20: memref<1x16x12xf32, #tpu.memory_space<vmem>>, %arg21: memref<20x32xf32, #tpu.memory_space<vmem>>, %arg22: memref<16x32xf32, #tpu.memory_space<vmem>>) attributes {dimension_semantics = [#tpu.dimension_semantics<parallel>, #tpu.dimension_semantics<arbitrary>], iteration_bounds = array<i64: 2, 3>, scalar_prefetch = 2 : i64, scratch_operands = 2 : i64, tpu.core_type = #tpu.core_type<tc>, window_params = [{transform_indices = @transform_0, window_bounds = array<i64: 1, 16, 4>}, {transform_indices = @transform_1, window_bounds = array<i64: 1, 16, 4>}, {pipeline_mode = #tpu.pipeline_mode<synchronous>, transform_indices = @transform_2, window_bounds = array<i64: 4, 32>}, {pipeline_mode = #tpu.pipeline_mode<synchronous>, transform_indices = @transform_3, window_bounds = array<i64: 1, 32>}, {pipeline_mode = #tpu.pipeline_mode<synchronous>, transform_indices = @transform_4, window_bounds = array<i64: 3, 160, 32>}, {pipeline_mode = #tpu.pipeline_mode<synchronous>, transform_indices = @transform_5, window_bounds = array<i64: 3, 1, 32>}, {pipeline_mode = #tpu.pipeline_mode<synchronous>, transform_indices = @transform_6, window_bounds = array<i64: 3, 160, 32>}, {pipeline_mode = #tpu.pipeline_mode<synchronous>, transform_indices = @transform_7, window_bounds = array<i64: 3, 1, 32>}, {pipeline_mode = #tpu.pipeline_mode<synchronous>, transform_indices = @transform_8, window_bounds = array<i64: 3, 32, 32>}, {pipeline_mode = #tpu.pipeline_mode<synchronous>, transform_indices = @transform_9, window_bounds = array<i64: 3, 1, 32>}, {pipeline_mode = #tpu.pipeline_mode<synchronous>, transform_indices = @transform_10, window_bounds = array<i64: 3, 32, 32>}, {pipeline_mode = #tpu.pipeline_mode<synchronous>, transform_indices = @transform_11, window_bounds = array<i64: 3, 1, 32>}, {pipeline_mode = #tpu.pipeline_mode<synchronous>, transform_indices = @transform_12, window_bounds = array<i64: 32, 4>}, {pipeline_mode = #tpu.pipeline_mode<synchronous>, transform_indices = @transform_13, window_bounds = array<i64: 1, 4>}, {pipeline_mode = #tpu.pipeline_mode<synchronous>, transform_indices = @transform_14, window_bounds = array<i64: 32, 4>}, {pipeline_mode = #tpu.pipeline_mode<synchronous>, transform_indices = @transform_15, window_bounds = array<i64: 1, 4>}, {transform_indices = @transform_16, window_bounds = array<i64: 1, 16, 12>}]} {
    %0 = arith.index_cast %arg0 : i32 to index
    %1 = memref.load %arg2[%0] : memref<2xi32, #tpu.memory_space<smem>>
    %2 = tpu.iota {dimensions = array<i32: 0>} : vector<16x1xi32>
    %3 = vector.broadcast %1 : i32 to vector<16x1xi32>
    %4 = arith.cmpi slt, %2, %3 : vector<16x1xi32>
    %5 = arith.extui %4 : vector<16x1xi1> to vector<16x1xi32>
    %6 = arith.sitofp %5 : vector<16x1xi32> to vector<16x1xf32>
    %c0_i32 = arith.constant 0 : i32
    %7 = arith.cmpi eq, %arg1, %c0_i32 : i32
    %8 = arith.extui %7 : i1 to i32
    %c0_i32_0 = arith.constant 0 : i32
    %9 = arith.cmpi ne, %8, %c0_i32_0 : i32
    scf.if %9 {
      %cst_28 = arith.constant 0.000000e+00 : f32
      %62 = vector.broadcast %cst_28 : f32 to vector<2x32xf32>
      %c0_29 = arith.constant 0 : index
      %c0_30 = arith.constant 0 : index
      %63 = vector.load %arg21[%c0_29, %c0_30] : memref<20x32xf32, #tpu.memory_space<vmem>>, vector<2x32xf32>
      tpu.vector_store %arg21[%c0_29, %c0_30], %62 {strides = array<i32>} : memref<20x32xf32, #tpu.memory_space<vmem>>, vector<2x32xf32>,
      %cst_31 = arith.constant 0.000000e+00 : f32
      %64 = vector.broadcast %cst_31 : f32 to vector<2x32xf32>
      %c18 = arith.constant 18 : index
      %c0_32 = arith.constant 0 : index
      %65 = vector.load %arg21[%c18, %c0_32] : memref<20x32xf32, #tpu.memory_space<vmem>>, vector<2x32xf32>
      tpu.vector_store %arg21[%c18, %c0_32], %64 {strides = array<i32>} : memref<20x32xf32, #tpu.memory_space<vmem>>, vector<2x32xf32>,
      %c0_33 = arith.constant 0 : index
      %c0_34 = arith.constant 0 : index
      %c0_35 = arith.constant 0 : index
      %66 = vector.load %arg4[%c0_33, %c0_34, %c0_35] : memref<1x16x4xf32, #tpu.memory_space<vmem>>, vector<1x16x4xf32>
      %67 = vector.shape_cast %66 : vector<1x16x4xf32> to vector<16x4xf32>
      %c0_36 = arith.constant 0 : index
      %c0_37 = arith.constant 0 : index
      %68 = vector.load %arg6[%c0_36, %c0_37] : memref<4x32xf32, #tpu.memory_space<vmem>>, vector<4x32xf32>
      %cst_38 = arith.constant dense<0.000000e+00> : vector<16x32xf32>
      %69 = tpu.matmul %67, %68, %cst_38 {dimension_numbers = #tpu.dot_dimension_numbers<[1], [0], [0], [1], [0, 0, 1, 1], [], []>} : vector<16x4xf32>, vector<4x32xf32>, vector<16x32xf32> -> vector<16x32xf32>
      %c0_39 = arith.constant 0 : index
      %c0_40 = arith.constant 0 : index
      %70 = vector.load %arg7[%c0_39, %c0_40] : memref<1x32xf32, #tpu.memory_space<vmem>>, vector<1x32xf32>
      %71 = vector.broadcast %70 : vector<1x32xf32> to vector<16x32xf32>
      %72 = arith.addf %69, %71 : vector<16x32xf32>
      %73 = vector.broadcast %6 : vector<16x1xf32> to vector<16x32xf32>
      %74 = arith.mulf %72, %73 : vector<16x32xf32>
      %c2_41 = arith.constant 2 : index
      %c0_42 = arith.constant 0 : index
      %75 = vector.load %arg21[%c2_41, %c0_42] : memref<20x32xf32, #tpu.memory_space<vmem>>, vector<16x32xf32>
      tpu.vector_store %arg21[%c2_41, %c0_42], %74 {strides = array<i32>} : memref<20x32xf32, #tpu.memory_space<vmem>>, vector<16x32xf32>,
    } else {
    }
    %c0 = arith.constant 0 : index
    %c0_1 = arith.constant 0 : index
    %10 = vector.load %arg21[%c0, %c0_1] : memref<20x32xf32, #tpu.memory_space<vmem>>, vector<16x32xf32>
    %c1 = arith.constant 1 : index
    %c0_2 = arith.constant 0 : index
    %11 = vector.load %arg21[%c1, %c0_2] : memref<20x32xf32, #tpu.memory_space<vmem>>, vector<16x32xf32>
    %c2 = arith.constant 2 : index
    %c0_3 = arith.constant 0 : index
    %12 = vector.load %arg21[%c2, %c0_3] : memref<20x32xf32, #tpu.memory_space<vmem>>, vector<16x32xf32>
    %c3 = arith.constant 3 : index
    %c0_4 = arith.constant 0 : index
    %13 = vector.load %arg21[%c3, %c0_4] : memref<20x32xf32, #tpu.memory_space<vmem>>, vector<16x32xf32>
    %c4 = arith.constant 4 : index
    %c0_5 = arith.constant 0 : index
    %14 = vector.load %arg21[%c4, %c0_5] : memref<20x32xf32, #tpu.memory_space<vmem>>, vector<16x32xf32>
    %15 = tpu.concatenate %10, %11, %12, %13, %14 in 1 : vector<16x32xf32>, vector<16x32xf32>, vector<16x32xf32>, vector<16x32xf32>, vector<16x32xf32> -> vector<16x160xf32>
    %16 = arith.index_cast %arg1 : i32 to index
    %c0_6 = arith.constant 0 : index
    %c0_7 = arith.constant 0 : index
    %17 = vector.load %arg8[%16, %c0_6, %c0_7] : memref<3x160x32xf32, #tpu.memory_space<vmem>>, vector<1x160x32xf32>
    %18 = vector.shape_cast %17 : vector<1x160x32xf32> to vector<160x32xf32>
    %cst = arith.constant dense<0.000000e+00> : vector<16x32xf32>
    %19 = tpu.matmul %15, %18, %cst {dimension_numbers = #tpu.dot_dimension_numbers<[1], [0], [0], [1], [0, 0, 1, 1], [], []>} : vector<16x160xf32>, vector<160x32xf32>, vector<16x32xf32> -> vector<16x32xf32>
    %20 = arith.index_cast %arg1 : i32 to index
    %c0_8 = arith.constant 0 : index
    %c0_9 = arith.constant 0 : index
    %21 = vector.load %arg9[%20, %c0_8, %c0_9] : memref<3x1x32xf32, #tpu.memory_space<vmem>>, vector<1x1x32xf32>
    %22 = vector.shape_cast %21 : vector<1x1x32xf32> to vector<1x32xf32>
    %23 = vector.broadcast %22 : vector<1x32xf32> to vector<16x32xf32>
    %24 = arith.addf %19, %23 : vector<16x32xf32>
    %25 = arith.index_cast %arg1 : i32 to index
    %c0_10 = arith.constant 0 : index
    %c0_11 = arith.constant 0 : index
    %26 = vector.load %arg10[%25, %c0_10, %c0_11] : memref<3x160x32xf32, #tpu.memory_space<vmem>>, vector<1x160x32xf32>
    %27 = vector.shape_cast %26 : vector<1x160x32xf32> to vector<160x32xf32>
    %cst_12 = arith.constant dense<0.000000e+00> : vector<16x32xf32>
    %28 = tpu.matmul %15, %27, %cst_12 {dimension_numbers = #tpu.dot_dimension_numbers<[1], [0], [0], [1], [0, 0, 1, 1], [], []>} : vector<16x160xf32>, vector<160x32xf32>, vector<16x32xf32> -> vector<16x32xf32>
    %29 = arith.index_cast %arg1 : i32 to index
    %c0_13 = arith.constant 0 : index
    %c0_14 = arith.constant 0 : index
    %30 = vector.load %arg11[%29, %c0_13, %c0_14] : memref<3x1x32xf32, #tpu.memory_space<vmem>>, vector<1x1x32xf32>
    %31 = vector.shape_cast %30 : vector<1x1x32xf32> to vector<1x32xf32>
    %32 = vector.broadcast %31 : vector<1x32xf32> to vector<16x32xf32>
    %33 = arith.addf %28, %32 : vector<16x32xf32>
    %34 = math.tanh %24 : vector<16x32xf32>
    %35 = arith.negf %33 : vector<16x32xf32>
    %36 = math.exp %35 : vector<16x32xf32>
    %cst_15 = arith.constant 1.000000e+00 : f32
    %37 = vector.broadcast %cst_15 : f32 to vector<16x32xf32>
    %38 = arith.addf %37, %36 : vector<16x32xf32>
    %39 = arith.divf %37, %38 : vector<16x32xf32>
    %40 = arith.mulf %34, %39 : vector<16x32xf32>
    %41 = arith.index_cast %arg1 : i32 to index
    %c0_16 = arith.constant 0 : index
    %c0_17 = arith.constant 0 : index
    %42 = vector.load %arg14[%41, %c0_16, %c0_17] : memref<3x32x32xf32, #tpu.memory_space<vmem>>, vector<1x32x32xf32>
    %43 = vector.shape_cast %42 : vector<1x32x32xf32> to vector<32x32xf32>
    %cst_18 = arith.constant dense<0.000000e+00> : vector<16x32xf32>
    %44 = tpu.matmul %40, %43, %cst_18 {dimension_numbers = #tpu.dot_dimension_numbers<[1], [0], [0], [1], [0, 0, 1, 1], [], []>} : vector<16x32xf32>, vector<32x32xf32>, vector<16x32xf32> -> vector<16x32xf32>
    %45 = arith.index_cast %arg1 : i32 to index
    %c0_19 = arith.constant 0 : index
    %c0_20 = arith.constant 0 : index
    %46 = vector.load %arg15[%45, %c0_19, %c0_20] : memref<3x1x32xf32, #tpu.memory_space<vmem>>, vector<1x1x32xf32>
    %47 = vector.shape_cast %46 : vector<1x1x32xf32> to vector<1x32xf32>
    %48 = vector.broadcast %47 : vector<1x32xf32> to vector<16x32xf32>
    %49 = arith.addf %44, %48 : vector<16x32xf32>
    %c0_i32_21 = arith.constant 0 : i32
    %50 = arith.cmpi eq, %arg1, %c0_i32_21 : i32
    %51 = arith.extui %50 : i1 to i32
    %c0_i32_22 = arith.constant 0 : i32
    %52 = arith.cmpi ne, %51, %c0_i32_22 : i32
    scf.if %52 {
      %c0_28 = arith.constant 0 : index
      %c0_29 = arith.constant 0 : index
      %62 = vector.load %arg22[%c0_28, %c0_29] : memref<16x32xf32, #tpu.memory_space<vmem>>, vector<16x32xf32>
      tpu.vector_store %arg22[%c0_28, %c0_29], %49 {strides = array<i32>} : memref<16x32xf32, #tpu.memory_space<vmem>>, vector<16x32xf32>,
    } else {
    }
    %c0_i32_23 = arith.constant 0 : i32
    %53 = arith.cmpi sgt, %arg1, %c0_i32_23 : i32
    %54 = arith.extui %53 : i1 to i32
    %c0_i32_24 = arith.constant 0 : i32
    %55 = arith.cmpi ne, %54, %c0_i32_24 : i32
    scf.if %55 {
      %c0_28 = arith.constant 0 : index
      %c0_29 = arith.constant 0 : index
      %62 = vector.load %arg22[%c0_28, %c0_29] : memref<16x32xf32, #tpu.memory_space<vmem>>, vector<16x32xf32>
      %63 = arith.addf %62, %49 : vector<16x32xf32>
      %c0_30 = arith.constant 0 : index
      %c0_31 = arith.constant 0 : index
      %64 = vector.load %arg22[%c0_30, %c0_31] : memref<16x32xf32, #tpu.memory_space<vmem>>, vector<16x32xf32>
      tpu.vector_store %arg22[%c0_30, %c0_31], %63 {strides = array<i32>} : memref<16x32xf32, #tpu.memory_space<vmem>>, vector<16x32xf32>,
    } else {
    }
    %c2_i32 = arith.constant 2 : i32
    %56 = arith.cmpi slt, %arg1, %c2_i32 : i32
    %57 = arith.extui %56 : i1 to i32
    %c0_i32_25 = arith.constant 0 : i32
    %58 = arith.cmpi ne, %57, %c0_i32_25 : i32
    scf.if %58 {
      %62 = arith.index_cast %arg1 : i32 to index
      %c0_28 = arith.constant 0 : index
      %c0_29 = arith.constant 0 : index
      %63 = vector.load %arg12[%62, %c0_28, %c0_29] : memref<3x32x32xf32, #tpu.memory_space<vmem>>, vector<1x32x32xf32>
      %64 = vector.shape_cast %63 : vector<1x32x32xf32> to vector<32x32xf32>
      %cst_30 = arith.constant dense<0.000000e+00> : vector<16x32xf32>
      %65 = tpu.matmul %40, %64, %cst_30 {dimension_numbers = #tpu.dot_dimension_numbers<[1], [0], [0], [1], [0, 0, 1, 1], [], []>} : vector<16x32xf32>, vector<32x32xf32>, vector<16x32xf32> -> vector<16x32xf32>
      %66 = arith.index_cast %arg1 : i32 to index
      %c0_31 = arith.constant 0 : index
      %c0_32 = arith.constant 0 : index
      %67 = vector.load %arg13[%66, %c0_31, %c0_32] : memref<3x1x32xf32, #tpu.memory_space<vmem>>, vector<1x1x32xf32>
      %68 = vector.shape_cast %67 : vector<1x1x32xf32> to vector<1x32xf32>
      %69 = vector.broadcast %68 : vector<1x32xf32> to vector<16x32xf32>
      %70 = arith.addf %65, %69 : vector<16x32xf32>
      %c2_33 = arith.constant 2 : index
      %c0_34 = arith.constant 0 : index
      %71 = vector.load %arg21[%c2_33, %c0_34] : memref<20x32xf32, #tpu.memory_space<vmem>>, vector<16x32xf32>
      %72 = arith.addf %71, %70 : vector<16x32xf32>
      %73 = vector.broadcast %6 : vector<16x1xf32> to vector<16x32xf32>
      %74 = arith.mulf %72, %73 : vector<16x32xf32>
      %c2_35 = arith.constant 2 : index
      %c0_36 = arith.constant 0 : index
      %75 = vector.load %arg21[%c2_35, %c0_36] : memref<20x32xf32, #tpu.memory_space<vmem>>, vector<16x32xf32>
      tpu.vector_store %arg21[%c2_35, %c0_36], %74 {strides = array<i32>} : memref<20x32xf32, #tpu.memory_space<vmem>>, vector<16x32xf32>,
    } else {
    }
    %c2_i32_26 = arith.constant 2 : i32
    %59 = arith.cmpi eq, %arg1, %c2_i32_26 : i32
    %60 = arith.extui %59 : i1 to i32
    %c0_i32_27 = arith.constant 0 : i32
    %61 = arith.cmpi ne, %60, %c0_i32_27 : i32
    scf.if %61 {
      %c0_28 = arith.constant 0 : index
      %c0_29 = arith.constant 0 : index
      %62 = vector.load %arg22[%c0_28, %c0_29] : memref<16x32xf32, #tpu.memory_space<vmem>>, vector<16x32xf32>
      %63 = vector.broadcast %6 : vector<16x1xf32> to vector<16x32xf32>
      %64 = arith.mulf %62, %63 : vector<16x32xf32>
      %c0_30 = arith.constant 0 : index
      %c0_31 = arith.constant 0 : index
      %65 = vector.load %arg16[%c0_30, %c0_31] : memref<32x4xf32, #tpu.memory_space<vmem>>, vector<32x4xf32>
      %cst_32 = arith.constant dense<0.000000e+00> : vector<16x4xf32>
      %66 = tpu.matmul %64, %65, %cst_32 {dimension_numbers = #tpu.dot_dimension_numbers<[1], [0], [0], [1], [0, 0, 1, 1], [], []>} : vector<16x32xf32>, vector<32x4xf32>, vector<16x4xf32> -> vector<16x4xf32>
      %c0_33 = arith.constant 0 : index
      %c0_34 = arith.constant 0 : index
      %67 = vector.load %arg17[%c0_33, %c0_34] : memref<1x4xf32, #tpu.memory_space<vmem>>, vector<1x4xf32>
      %68 = vector.broadcast %67 : vector<1x4xf32> to vector<16x4xf32>
      %69 = arith.addf %66, %68 : vector<16x4xf32>
      %70 = vector.broadcast %6 : vector<16x1xf32> to vector<16x4xf32>
      %71 = arith.mulf %69, %70 : vector<16x4xf32>
      %c0_35 = arith.constant 0 : index
      %c0_36 = arith.constant 0 : index
      %72 = vector.load %arg18[%c0_35, %c0_36] : memref<32x4xf32, #tpu.memory_space<vmem>>, vector<32x4xf32>
      %cst_37 = arith.constant dense<0.000000e+00> : vector<16x4xf32>
      %73 = tpu.matmul %64, %72, %cst_37 {dimension_numbers = #tpu.dot_dimension_numbers<[1], [0], [0], [1], [0, 0, 1, 1], [], []>} : vector<16x32xf32>, vector<32x4xf32>, vector<16x4xf32> -> vector<16x4xf32>
      %c0_38 = arith.constant 0 : index
      %c0_39 = arith.constant 0 : index
      %74 = vector.load %arg19[%c0_38, %c0_39] : memref<1x4xf32, #tpu.memory_space<vmem>>, vector<1x4xf32>
      %75 = vector.broadcast %74 : vector<1x4xf32> to vector<16x4xf32>
      %76 = arith.addf %73, %75 : vector<16x4xf32>
      %77 = vector.broadcast %6 : vector<16x1xf32> to vector<16x4xf32>
      %78 = arith.mulf %76, %77 : vector<16x4xf32>
      %c0_40 = arith.constant 0 : index
      %c0_41 = arith.constant 0 : index
      %c0_42 = arith.constant 0 : index
      %79 = vector.load %arg5[%c0_40, %c0_41, %c0_42] : memref<1x16x4xf32, #tpu.memory_space<vmem>>, vector<1x16x4xf32>
      %80 = vector.shape_cast %79 : vector<1x16x4xf32> to vector<16x4xf32>
      %cst_43 = arith.constant 1.000000e+00 : f32
      %81 = vector.broadcast %cst_43 : f32 to vector<16x4xf32>
      %82 = arith.mulf %80, %81 : vector<16x4xf32>
      %83 = math.exp %78 : vector<16x4xf32>
      %84 = arith.mulf %82, %83 : vector<16x4xf32>
      %85 = arith.addf %71, %84 : vector<16x4xf32>
      %86 = vector.broadcast %6 : vector<16x1xf32> to vector<16x4xf32>
      %87 = arith.mulf %85, %86 : vector<16x4xf32>
      %88 = tpu.concatenate %87, %71, %78 in 1 : vector<16x4xf32>, vector<16x4xf32>, vector<16x4xf32> -> vector<16x12xf32>
      %c0_44 = arith.constant 0 : index
      %c0_45 = arith.constant 0 : index
      %c0_46 = arith.constant 0 : index
      %89 = vector.load %arg20[%c0_44, %c0_45, %c0_46] : memref<1x16x12xf32, #tpu.memory_space<vmem>>, vector<1x16x12xf32>
      %90 = vector.shape_cast %89 : vector<1x16x12xf32> to vector<16x12xf32>
      %91 = vector.shape_cast %88 : vector<16x12xf32> to vector<1x16x12xf32>
      tpu.vector_store %arg20[%c0_44, %c0_45, %c0_46], %91 {strides = array<i32>} : memref<1x16x12xf32, #tpu.memory_space<vmem>>, vector<1x16x12xf32>,
    } else {
    }
    return
  }
  func.func @transform_0(%arg0: i32, %arg1: i32, %arg2: memref<2xi32, #tpu.memory_space<smem>>, %arg3: memref<3x5xi32, #tpu.memory_space<smem>>) -> (i32, i32, i32) {
    %c0_i32 = arith.constant 0 : i32
    %c0_i32_0 = arith.constant 0 : i32
    %c0_i32_1 = arith.constant 0 : i32
    return %arg0, %c0_i32, %c0_i32_0 : i32, i32, i32
  }
  func.func @transform_1(%arg0: i32, %arg1: i32, %arg2: memref<2xi32, #tpu.memory_space<smem>>, %arg3: memref<3x5xi32, #tpu.memory_space<smem>>) -> (i32, i32, i32) {
    %c0_i32 = arith.constant 0 : i32
    %c0_i32_0 = arith.constant 0 : i32
    %c0_i32_1 = arith.constant 0 : i32
    return %arg0, %c0_i32, %c0_i32_0 : i32, i32, i32
  }
  func.func @transform_2(%arg0: i32, %arg1: i32, %arg2: memref<2xi32, #tpu.memory_space<smem>>, %arg3: memref<3x5xi32, #tpu.memory_space<smem>>) -> (i32, i32) {
    %c0_i32 = arith.constant 0 : i32
    %c0_i32_0 = arith.constant 0 : i32
    %c0_i32_1 = arith.constant 0 : i32
    return %c0_i32, %c0_i32_0 : i32, i32
  }
  func.func @transform_3(%arg0: i32, %arg1: i32, %arg2: memref<2xi32, #tpu.memory_space<smem>>, %arg3: memref<3x5xi32, #tpu.memory_space<smem>>) -> (i32, i32) {
    %c0_i32 = arith.constant 0 : i32
    %c0_i32_0 = arith.constant 0 : i32
    %c0_i32_1 = arith.constant 0 : i32
    return %c0_i32, %c0_i32_0 : i32, i32
  }
  func.func @transform_4(%arg0: i32, %arg1: i32, %arg2: memref<2xi32, #tpu.memory_space<smem>>, %arg3: memref<3x5xi32, #tpu.memory_space<smem>>) -> (i32, i32, i32) {
    %c0_i32 = arith.constant 0 : i32
    %c0_i32_0 = arith.constant 0 : i32
    %c0_i32_1 = arith.constant 0 : i32
    %c0_i32_2 = arith.constant 0 : i32
    return %c0_i32, %c0_i32_0, %c0_i32_1 : i32, i32, i32
  }
  func.func @transform_5(%arg0: i32, %arg1: i32, %arg2: memref<2xi32, #tpu.memory_space<smem>>, %arg3: memref<3x5xi32, #tpu.memory_space<smem>>) -> (i32, i32, i32) {
    %c0_i32 = arith.constant 0 : i32
    %c0_i32_0 = arith.constant 0 : i32
    %c0_i32_1 = arith.constant 0 : i32
    %c0_i32_2 = arith.constant 0 : i32
    return %c0_i32, %c0_i32_0, %c0_i32_1 : i32, i32, i32
  }
  func.func @transform_6(%arg0: i32, %arg1: i32, %arg2: memref<2xi32, #tpu.memory_space<smem>>, %arg3: memref<3x5xi32, #tpu.memory_space<smem>>) -> (i32, i32, i32) {
    %c0_i32 = arith.constant 0 : i32
    %c0_i32_0 = arith.constant 0 : i32
    %c0_i32_1 = arith.constant 0 : i32
    %c0_i32_2 = arith.constant 0 : i32
    return %c0_i32, %c0_i32_0, %c0_i32_1 : i32, i32, i32
  }
  func.func @transform_7(%arg0: i32, %arg1: i32, %arg2: memref<2xi32, #tpu.memory_space<smem>>, %arg3: memref<3x5xi32, #tpu.memory_space<smem>>) -> (i32, i32, i32) {
    %c0_i32 = arith.constant 0 : i32
    %c0_i32_0 = arith.constant 0 : i32
    %c0_i32_1 = arith.constant 0 : i32
    %c0_i32_2 = arith.constant 0 : i32
    return %c0_i32, %c0_i32_0, %c0_i32_1 : i32, i32, i32
  }
  func.func @transform_8(%arg0: i32, %arg1: i32, %arg2: memref<2xi32, #tpu.memory_space<smem>>, %arg3: memref<3x5xi32, #tpu.memory_space<smem>>) -> (i32, i32, i32) {
    %c0_i32 = arith.constant 0 : i32
    %c0_i32_0 = arith.constant 0 : i32
    %c0_i32_1 = arith.constant 0 : i32
    %c0_i32_2 = arith.constant 0 : i32
    return %c0_i32, %c0_i32_0, %c0_i32_1 : i32, i32, i32
  }
  func.func @transform_9(%arg0: i32, %arg1: i32, %arg2: memref<2xi32, #tpu.memory_space<smem>>, %arg3: memref<3x5xi32, #tpu.memory_space<smem>>) -> (i32, i32, i32) {
    %c0_i32 = arith.constant 0 : i32
    %c0_i32_0 = arith.constant 0 : i32
    %c0_i32_1 = arith.constant 0 : i32
    %c0_i32_2 = arith.constant 0 : i32
    return %c0_i32, %c0_i32_0, %c0_i32_1 : i32, i32, i32
  }
  func.func @transform_10(%arg0: i32, %arg1: i32, %arg2: memref<2xi32, #tpu.memory_space<smem>>, %arg3: memref<3x5xi32, #tpu.memory_space<smem>>) -> (i32, i32, i32) {
    %c0_i32 = arith.constant 0 : i32
    %c0_i32_0 = arith.constant 0 : i32
    %c0_i32_1 = arith.constant 0 : i32
    %c0_i32_2 = arith.constant 0 : i32
    return %c0_i32, %c0_i32_0, %c0_i32_1 : i32, i32, i32
  }
  func.func @transform_11(%arg0: i32, %arg1: i32, %arg2: memref<2xi32, #tpu.memory_space<smem>>, %arg3: memref<3x5xi32, #tpu.memory_space<smem>>) -> (i32, i32, i32) {
    %c0_i32 = arith.constant 0 : i32
    %c0_i32_0 = arith.constant 0 : i32
    %c0_i32_1 = arith.constant 0 : i32
    %c0_i32_2 = arith.constant 0 : i32
    return %c0_i32, %c0_i32_0, %c0_i32_1 : i32, i32, i32
  }
  func.func @transform_12(%arg0: i32, %arg1: i32, %arg2: memref<2xi32, #tpu.memory_space<smem>>, %arg3: memref<3x5xi32, #tpu.memory_space<smem>>) -> (i32, i32) {
    %c0_i32 = arith.constant 0 : i32
    %c0_i32_0 = arith.constant 0 : i32
    %c0_i32_1 = arith.constant 0 : i32
    return %c0_i32, %c0_i32_0 : i32, i32
  }
  func.func @transform_13(%arg0: i32, %arg1: i32, %arg2: memref<2xi32, #tpu.memory_space<smem>>, %arg3: memref<3x5xi32, #tpu.memory_space<smem>>) -> (i32, i32) {
    %c0_i32 = arith.constant 0 : i32
    %c0_i32_0 = arith.constant 0 : i32
    %c0_i32_1 = arith.constant 0 : i32
    return %c0_i32, %c0_i32_0 : i32, i32
  }
  func.func @transform_14(%arg0: i32, %arg1: i32, %arg2: memref<2xi32, #tpu.memory_space<smem>>, %arg3: memref<3x5xi32, #tpu.memory_space<smem>>) -> (i32, i32) {
    %c0_i32 = arith.constant 0 : i32
    %c0_i32_0 = arith.constant 0 : i32
    %c0_i32_1 = arith.constant 0 : i32
    return %c0_i32, %c0_i32_0 : i32, i32
  }
  func.func @transform_15(%arg0: i32, %arg1: i32, %arg2: memref<2xi32, #tpu.memory_space<smem>>, %arg3: memref<3x5xi32, #tpu.memory_space<smem>>) -> (i32, i32) {
    %c0_i32 = arith.constant 0 : i32
    %c0_i32_0 = arith.constant 0 : i32
    %c0_i32_1 = arith.constant 0 : i32
    return %c0_i32, %c0_i32_0 : i32, i32
  }
  func.func @transform_16(%arg0: i32, %arg1: i32, %arg2: memref<2xi32, #tpu.memory_space<smem>>, %arg3: memref<3x5xi32, #tpu.memory_space<smem>>) -> (i32, i32, i32) {
    %c0_i32 = arith.constant 0 : i32
    %c0_i32_0 = arith.constant 0 : i32
    %c0_i32_1 = arith.constant 0 : i32
    return %arg0, %c0_i32, %c0_i32_0 : i32, i32, i32
  }
}

</mosaic_0001>

<llo_original>
// kernel: tpu_custom_call.1
$region0: #{tpu_custom_call.1}
  #allocation0 [shape = 'u32[]', space=smem, size = 0x4, offset = 0x4, fixed_abs, tag = 'smem constant byte address 0x4 - core index']
  #allocation1 [shape = 'u32[144,128]{1,0:T(1,128)}', space=vmem, size = 0x12000, scoped, tag = 'internal scratch']
  #allocation2 [shape = 'f32[20,32]{1,0:T(8,128)}', space=vmem, size = 0x3000, scoped, tag = 'scratch operand']
  #allocation3 [shape = 'f32[16,32]{1,0:T(8,128)}', space=vmem, size = 0x2000, scoped, tag = 'scratch operand']
  #allocation4 [shape = 's32[1]{0}', space=sflag, size = 0x4, scoped, tag = 'scoped memory for tpu_custom_call.1']
  #allocation5 [shape = 'u8[512]{0}', space=smem, size = 0x200, scoped, tag = 'prefetched SMEM operand 0']
  #allocation6 [shape = 'u8[2048]{0}', space=smem, size = 0x800, scoped, tag = 'prefetched SMEM operand 1']
  %s0 = inlined_call_operand.vmem [shape: s32[2], index: 0, kind: input, shape index: {}]
  %s1 = inlined_call_operand.vmem [shape: s32[3,5], index: 1, kind: input, shape index: {}]
  %s2 = inlined_call_operand.vmem [shape: f32[2,16,4], index: 2, kind: input, shape index: {}]
  %s3 = inlined_call_operand.vmem [shape: f32[2,16,4], index: 3, kind: input, shape index: {}]
  %s4 = inlined_call_operand.vmem [shape: f32[4,32], index: 4, kind: input, shape index: {}]
  %s5 = inlined_call_operand.vmem [shape: f32[1,32], index: 5, kind: input, shape index: {}]
  %s6 = inlined_call_operand.vmem [shape: f32[3,160,32], index: 6, kind: input, shape index: {}]
  %s7 = inlined_call_operand.vmem [shape: f32[3,1,32], index: 7, kind: input, shape index: {}]
  %s8 = inlined_call_operand.vmem [shape: f32[3,160,32], index: 8, kind: input, shape index: {}]
  %s9 = inlined_call_operand.vmem [shape: f32[3,1,32], index: 9, kind: input, shape index: {}]
  %s10 = inlined_call_operand.vmem [shape: f32[3,32,32], index: 10, kind: input, shape index: {}]
  %s11 = inlined_call_operand.vmem [shape: f32[3,1,32], index: 11, kind: input, shape index: {}]
  %s12 = inlined_call_operand.vmem [shape: f32[3,32,32], index: 12, kind: input, shape index: {}]
  %s13 = inlined_call_operand.vmem [shape: f32[3,1,32], index: 13, kind: input, shape index: {}]
  %s14 = inlined_call_operand.vmem [shape: f32[32,4], index: 14, kind: input, shape index: {}]
  %s15 = inlined_call_operand.vmem [shape: f32[1,4], index: 15, kind: input, shape index: {}]
  %s16 = inlined_call_operand.vmem [shape: f32[32,4], index: 16, kind: input, shape index: {}]
  %s17 = inlined_call_operand.vmem [shape: f32[1,4], index: 17, kind: input, shape index: {}]
  %s18 = inlined_call_operand.vmem [shape: f32[2,16,12], index: 18, kind: output, shape index: {}]
  %s19 = sld [smem:[#allocation0]]
  $region117: #{tpu_custom_call.1} parent=0
    _
  %s21 = ssub.s32 1, %s19
  %s22 = scalar_select 0, %s21, %s19
  %s23 = sshll.u32 %s0, 4
  %s24 = int_to_ptr.vmem [resolvable:$true] %s23
  %26 = dma.vmem_to_smem %s24, 16, [#allocation5], [#allocation4]
  %s27 = sshll.u32 %s1, 4
  %s28 = int_to_ptr.vmem [resolvable:$true] %s27
  %30 = dma.vmem_to_smem %s28, 64, [#allocation6], [#allocation4]
  %31 = dma.done [#allocation4], 80
  %32 = sfence
  loop: start=0, step=1, limit=8
  $region2: #{tpu_custom_call.1} parent=0 // loop_pre_header
    _
  $region3: #{tpu_custom_call.1} parent=0 // loop_header
    %s34 = sphi 0, %s38
    %p35 = scmp.ge.s32.totalorder %s34, 8
    %s41 = sphi 0, %s53
    %s42 = sphi 0, %s49
    %s43 = sphi 0, %s41
    %s44 = sphi 0, %s42
    %s45 = sphi 0, %s43
    %s46 = sphi 0, %s44
    %s56 = sphi 0, %s58
    %s59 = sphi 0, %s56
    %s60 = sphi 0, %s59
    %s76 = sphi 0, %s60
    %s82 = sphi 0, %s84
    %s85 = sphi 0, %s82
    %s86 = sphi 0, %s85
    %s102 = sphi 0, %s86
    %s106 = sphi 0, %s106
    %s108 = sphi 0, %s106
    %s109 = sphi 0, %s108
    %s123 = sphi 0, %s109
    %s127 = sphi 0, %s127
    %s129 = sphi 0, %s127
    %s130 = sphi 0, %s129
    %s144 = sphi 0, %s130
    %s148 = sphi 0, %s148
    %s150 = sphi 0, %s148
    %s151 = sphi 0, %s150
    %s165 = sphi 0, %s151
    %s169 = sphi 0, %s169
    %s171 = sphi 0, %s169
    %s172 = sphi 0, %s171
    %s186 = sphi 0, %s172
    %s190 = sphi 0, %s190
    %s192 = sphi 0, %s190
    %s193 = sphi 0, %s192
    %s207 = sphi 0, %s193
    %s211 = sphi 0, %s211
    %s213 = sphi 0, %s211
    %s214 = sphi 0, %s213
    %s228 = sphi 0, %s214
    %s232 = sphi 0, %s232
    %s234 = sphi 0, %s232
    %s235 = sphi 0, %s234
    %s249 = sphi 0, %s235
    %s253 = sphi 0, %s253
    %s255 = sphi 0, %s253
    %s256 = sphi 0, %s255
    %s270 = sphi 0, %s256
    %s274 = sphi 0, %s274
    %s276 = sphi 0, %s274
    %s277 = sphi 0, %s276
    %s291 = sphi 0, %s277
    %s295 = sphi 0, %s295
    %s297 = sphi 0, %s295
    %s298 = sphi 0, %s297
    %s312 = sphi 0, %s298
    %s316 = sphi 0, %s316
    %s318 = sphi 0, %s316
    %s319 = sphi 0, %s318
    %s333 = sphi 0, %s319
    %s337 = sphi 0, %s337
    %s339 = sphi 0, %s337
    %s340 = sphi 0, %s339
    %s354 = sphi 0, %s340
    %s358 = sphi 0, %s358
    %s360 = sphi 0, %s358
    %s361 = sphi 0, %s360
    %s375 = sphi 0, %s361
    %s379 = sphi 0, %s379
    %s381 = sphi 0, %s379
    %s382 = sphi 0, %s381
    %s396 = sphi 0, %s382
    %s402 = sphi 0, %s404
    %s405 = sphi 0, %s402
    %s406 = sphi 0, %s405
    %s422 = sphi 0, %s406
  $region4: #{tpu_custom_call.1} parent=0 // loop_header_branch
    %37 = sbr.rel (%p35) target = $region8
  $region5: #{tpu_custom_call.1} parent=0 // loop_body
    %s39 = ssub.s32 %s34, 1
    %s40 = ssub.s32 %s34, 2
    %s47 = sadd.s32 1, %s42
    %p48 = scmp.ge.s32.totalorder %s47, 3
    %s49 = scalar_select %p48, 0, %s47
    %s50 = sadd.s32 1, %s41
    %s51 = scalar_select %p48, %s50, %s41
    %p52 = scmp.ge.s32.totalorder %s51, 2
    %s53 = scalar_select %p52, 0, %s51
    %s54 = ssub.s32 %s41, %s53
    %p55 = scmp.eq.s32.totalorder %s54, 0
    %s57 = sadd.s32 %s56, 1
    %s58 = scalar_select %p55, %s56, %s57
    %p61 = pneg %p55
    %p62 = scmp.eq.s32.totalorder %s34, 5
    %p63 = por %p61, %p62
    %p64 = scmp.ne.s32.totalorder %s56, %s59
    %p65 = scmp.eq.s32.totalorder %s34, 0
    %p66 = por %p64, %p65
    %p67 = scmp.ne.s32.totalorder %s56, %s59
    %p68 = scmp.eq.s32.totalorder %s39, 5
    %p69 = por %p67, %p68
    %p70 = scmp.ne.s32.totalorder %s59, %s60
    %p71 = scmp.eq.s32.totalorder %s39, 0
    %p72 = por %p70, %p71
    %p73 = scmp.ne.s32.totalorder %s59, %s60
    %p74 = scmp.eq.s32.totalorder %s40, 5
    %p75 = por %p73, %p74
    %p77 = scmp.ne.s32.totalorder %s60, %s76
    %p78 = scmp.eq.s32.totalorder %s40, 0
    %p79 = por %p77, %p78
    %s80 = ssub.s32 %s41, %s53
    %p81 = scmp.eq.s32.totalorder %s80, 0
    %s83 = sadd.s32 %s82, 1
    %s84 = scalar_select %p81, %s82, %s83
    %p87 = pneg %p81
    %p88 = scmp.eq.s32.totalorder %s34, 5
    %p89 = por %p87, %p88
    %p90 = scmp.ne.s32.totalorder %s82, %s85
    %p91 = scmp.eq.s32.totalorder %s34, 0
    %p92 = por %p90, %p91
    %p93 = scmp.ne.s32.totalorder %s82, %s85
    %p94 = scmp.eq.s32.totalorder %s39, 5
    %p95 = por %p93, %p94
    %p96 = scmp.ne.s32.totalorder %s85, %s86
    %p97 = scmp.eq.s32.totalorder %s39, 0
    %p98 = por %p96, %p97
    %p99 = scmp.ne.s32.totalorder %s85, %s86
    %p100 = scmp.eq.s32.totalorder %s40, 5
    %p101 = por %p99, %p100
    %p103 = scmp.ne.s32.totalorder %s86, %s102
    %p104 = scmp.eq.s32.totalorder %s40, 0
    %p105 = por %p103, %p104
    %s107 = sadd.s32 %s106, 1
    %p110 = scmp.eq.s32.totalorder %s34, 5
    %p111 = scmp.ne.s32.totalorder %s106, %s108
    %p112 = scmp.eq.s32.totalorder %s34, 0
    %p113 = por %p111, %p112
    %p114 = scmp.ne.s32.totalorder %s106, %s108
    %p115 = scmp.eq.s32.totalorder %s39, 5
    %p116 = por %p114, %p115
    %p117 = scmp.ne.s32.totalorder %s108, %s109
    %p118 = scmp.eq.s32.totalorder %s39, 0
    %p119 = por %p117, %p118
    %p120 = scmp.ne.s32.totalorder %s108, %s109
    %p121 = scmp.eq.s32.totalorder %s40, 5
    %p122 = por %p120, %p121
    %p124 = scmp.ne.s32.totalorder %s109, %s123
    %p125 = scmp.eq.s32.totalorder %s40, 0
    %p126 = por %p124, %p125
    %s128 = sadd.s32 %s127, 1
    %p131 = scmp.eq.s32.totalorder %s34, 5
    %p132 = scmp.ne.s32.totalorder %s127, %s129
    %p133 = scmp.eq.s32.totalorder %s34, 0
    %p134 = por %p132, %p133
    %p135 = scmp.ne.s32.totalorder %s127, %s129
    %p136 = scmp.eq.s32.totalorder %s39, 5
    %p137 = por %p135, %p136
    %p138 = scmp.ne.s32.totalorder %s129, %s130
    %p139 = scmp.eq.s32.totalorder %s39, 0
    %p140 = por %p138, %p139
    %p141 = scmp.ne.s32.totalorder %s129, %s130
    %p142 = scmp.eq.s32.totalorder %s40, 5
    %p143 = por %p141, %p142
    %p145 = scmp.ne.s32.totalorder %s130, %s144
    %p146 = scmp.eq.s32.totalorder %s40, 0
    %p147 = por %p145, %p146
    %s149 = sadd.s32 %s148, 1
    %p152 = scmp.eq.s32.totalorder %s34, 5
    %p153 = scmp.ne.s32.totalorder %s148, %s150
    %p154 = scmp.eq.s32.totalorder %s34, 0
    %p155 = por %p153, %p154
    %p156 = scmp.ne.s32.totalorder %s148, %s150
    %p157 = scmp.eq.s32.totalorder %s39, 5
    %p158 = por %p156, %p157
    %p159 = scmp.ne.s32.totalorder %s150, %s151
    %p160 = scmp.eq.s32.totalorder %s39, 0
    %p161 = por %p159, %p160
    %p162 = scmp.ne.s32.totalorder %s150, %s151
    %p163 = scmp.eq.s32.totalorder %s40, 5
    %p164 = por %p162, %p163
    %p166 = scmp.ne.s32.totalorder %s151, %s165
    %p167 = scmp.eq.s32.totalorder %s40, 0
    %p168 = por %p166, %p167
    %s170 = sadd.s32 %s169, 1
    %p173 = scmp.eq.s32.totalorder %s34, 5
    %p174 = scmp.ne.s32.totalorder %s169, %s171
    %p175 = scmp.eq.s32.totalorder %s34, 0
    %p176 = por %p174, %p175
    %p177 = scmp.ne.s32.totalorder %s169, %s171
    %p178 = scmp.eq.s32.totalorder %s39, 5
    %p179 = por %p177, %p178
    %p180 = scmp.ne.s32.totalorder %s171, %s172
    %p181 = scmp.eq.s32.totalorder %s39, 0
    %p182 = por %p180, %p181
    %p183 = scmp.ne.s32.totalorder %s171, %s172
    %p184 = scmp.eq.s32.totalorder %s40, 5
    %p185 = por %p183, %p184
    %p187 = scmp.ne.s32.totalorder %s172, %s186
    %p188 = scmp.eq.s32.totalorder %s40, 0
    %p189 = por %p187, %p188
    %s191 = sadd.s32 %s190, 1
    %p194 = scmp.eq.s32.totalorder %s34, 5
    %p195 = scmp.ne.s32.totalorder %s190, %s192
    %p196 = scmp.eq.s32.totalorder %s34, 0
    %p197 = por %p195, %p196
    %p198 = scmp.ne.s32.totalorder %s190, %s192
    %p199 = scmp.eq.s32.totalorder %s39, 5
    %p200 = por %p198, %p199
    %p201 = scmp.ne.s32.totalorder %s192, %s193
    %p202 = scmp.eq.s32.totalorder %s39, 0
    %p203 = por %p201, %p202
    %p204 = scmp.ne.s32.totalorder %s192, %s193
    %p205 = scmp.eq.s32.totalorder %s40, 5
    %p206 = por %p204, %p205
    %p208 = scmp.ne.s32.totalorder %s193, %s207
    %p209 = scmp.eq.s32.totalorder %s40, 0
    %p210 = por %p208, %p209
    %s212 = sadd.s32 %s211, 1
    %p215 = scmp.eq.s32.totalorder %s34, 5
    %p216 = scmp.ne.s32.totalorder %s211, %s213
    %p217 = scmp.eq.s32.totalorder %s34, 0
    %p218 = por %p216, %p217
    %p219 = scmp.ne.s32.totalorder %s211, %s213
    %p220 = scmp.eq.s32.totalorder %s39, 5
    %p221 = por %p219, %p220
    %p222 = scmp.ne.s32.totalorder %s213, %s214
    %p223 = scmp.eq.s32.totalorder %s39, 0
    %p224 = por %p222, %p223
    %p225 = scmp.ne.s32.totalorder %s213, %s214
    %p226 = scmp.eq.s32.totalorder %s40, 5
    %p227 = por %p225, %p226
    %p229 = scmp.ne.s32.totalorder %s214, %s228
    %p230 = scmp.eq.s32.totalorder %s40, 0
    %p231 = por %p229, %p230
    %s233 = sadd.s32 %s232, 1
    %p236 = scmp.eq.s32.totalorder %s34, 5
    %p237 = scmp.ne.s32.totalorder %s232, %s234
    %p238 = scmp.eq.s32.totalorder %s34, 0
    %p239 = por %p237, %p238
    %p240 = scmp.ne.s32.totalorder %s232, %s234
    %p241 = scmp.eq.s32.totalorder %s39, 5
    %p242 = por %p240, %p241
    %p243 = scmp.ne.s32.totalorder %s234, %s235
    %p244 = scmp.eq.s32.totalorder %s39, 0
    %p245 = por %p243, %p244
    %p246 = scmp.ne.s32.totalorder %s234, %s235
    %p247 = scmp.eq.s32.totalorder %s40, 5
    %p248 = por %p246, %p247
    %p250 = scmp.ne.s32.totalorder %s235, %s249
    %p251 = scmp.eq.s32.totalorder %s40, 0
    %p252 = por %p250, %p251
    %s254 = sadd.s32 %s253, 1
    %p257 = scmp.eq.s32.totalorder %s34, 5
    %p258 = scmp.ne.s32.totalorder %s253, %s255
    %p259 = scmp.eq.s32.totalorder %s34, 0
    %p260 = por %p258, %p259
    %p261 = scmp.ne.s32.totalorder %s253, %s255
    %p262 = scmp.eq.s32.totalorder %s39, 5
    %p263 = por %p261, %p262
    %p264 = scmp.ne.s32.totalorder %s255, %s256
    %p265 = scmp.eq.s32.totalorder %s39, 0
    %p266 = por %p264, %p265
    %p267 = scmp.ne.s32.totalorder %s255, %s256
    %p268 = scmp.eq.s32.totalorder %s40, 5
    %p269 = por %p267, %p268
    %p271 = scmp.ne.s32.totalorder %s256, %s270
    %p272 = scmp.eq.s32.totalorder %s40, 0
    %p273 = por %p271, %p272
    %s275 = sadd.s32 %s274, 1
    %p278 = scmp.eq.s32.totalorder %s34, 5
    %p279 = scmp.ne.s32.totalorder %s274, %s276
    %p280 = scmp.eq.s32.totalorder %s34, 0
    %p281 = por %p279, %p280
    %p282 = scmp.ne.s32.totalorder %s274, %s276
    %p283 = scmp.eq.s32.totalorder %s39, 5
    %p284 = por %p282, %p283
    %p285 = scmp.ne.s32.totalorder %s276, %s277
    %p286 = scmp.eq.s32.totalorder %s39, 0
    %p287 = por %p285, %p286
    %p288 = scmp.ne.s32.totalorder %s276, %s277
    %p289 = scmp.eq.s32.totalorder %s40, 5
    %p290 = por %p288, %p289
    %p292 = scmp.ne.s32.totalorder %s277, %s291
    %p293 = scmp.eq.s32.totalorder %s40, 0
    %p294 = por %p292, %p293
    %s296 = sadd.s32 %s295, 1
    %p299 = scmp.eq.s32.totalorder %s34, 5
    %p300 = scmp.ne.s32.totalorder %s295, %s297
    %p301 = scmp.eq.s32.totalorder %s34, 0
    %p302 = por %p300, %p301
    %p303 = scmp.ne.s32.totalorder %s295, %s297
    %p304 = scmp.eq.s32.totalorder %s39, 5
    %p305 = por %p303, %p304
    %p306 = scmp.ne.s32.totalorder %s297, %s298
    %p307 = scmp.eq.s32.totalorder %s39, 0
    %p308 = por %p306, %p307
    %p309 = scmp.ne.s32.totalorder %s297, %s298
    %p310 = scmp.eq.s32.totalorder %s40, 5
    %p311 = por %p309, %p310
    %p313 = scmp.ne.s32.totalorder %s298, %s312
    %p314 = scmp.eq.s32.totalorder %s40, 0
    %p315 = por %p313, %p314
    %s317 = sadd.s32 %s316, 1
    %p320 = scmp.eq.s32.totalorder %s34, 5
    %p321 = scmp.ne.s32.totalorder %s316, %s318
    %p322 = scmp.eq.s32.totalorder %s34, 0
    %p323 = por %p321, %p322
    %p324 = scmp.ne.s32.totalorder %s316, %s318
    %p325 = scmp.eq.s32.totalorder %s39, 5
    %p326 = por %p324, %p325
    %p327 = scmp.ne.s32.totalorder %s318, %s319
    %p328 = scmp.eq.s32.totalorder %s39, 0
    %p329 = por %p327, %p328
    %p330 = scmp.ne.s32.totalorder %s318, %s319
    %p331 = scmp.eq.s32.totalorder %s40, 5
    %p332 = por %p330, %p331
    %p334 = scmp.ne.s32.totalorder %s319, %s333
    %p335 = scmp.eq.s32.totalorder %s40, 0
    %p336 = por %p334, %p335
    %s338 = sadd.s32 %s337, 1
    %p341 = scmp.eq.s32.totalorder %s34, 5
    %p342 = scmp.ne.s32.totalorder %s337, %s339
    %p343 = scmp.eq.s32.totalorder %s34, 0
    %p344 = por %p342, %p343
    %p345 = scmp.ne.s32.totalorder %s337, %s339
    %p346 = scmp.eq.s32.totalorder %s39, 5
    %p347 = por %p345, %p346
    %p348 = scmp.ne.s32.totalorder %s339, %s340
    %p349 = scmp.eq.s32.totalorder %s39, 0
    %p350 = por %p348, %p349
    %p351 = scmp.ne.s32.totalorder %s339, %s340
    %p352 = scmp.eq.s32.totalorder %s40, 5
    %p353 = por %p351, %p352
    %p355 = scmp.ne.s32.totalorder %s340, %s354
    %p356 = scmp.eq.s32.totalorder %s40, 0
    %p357 = por %p355, %p356
    %s359 = sadd.s32 %s358, 1
    %p362 = scmp.eq.s32.totalorder %s34, 5
    %p363 = scmp.ne.s32.totalorder %s358, %s360
    %p364 = scmp.eq.s32.totalorder %s34, 0
    %p365 = por %p363, %p364
    %p366 = scmp.ne.s32.totalorder %s358, %s360
    %p367 = scmp.eq.s32.totalorder %s39, 5
    %p368 = por %p366, %p367
    %p369 = scmp.ne.s32.totalorder %s360, %s361
    %p370 = scmp.eq.s32.totalorder %s39, 0
    %p371 = por %p369, %p370
    %p372 = scmp.ne.s32.totalorder %s360, %s361
    %p373 = scmp.eq.s32.totalorder %s40, 5
    %p374 = por %p372, %p373
    %p376 = scmp.ne.s32.totalorder %s361, %s375
    %p377 = scmp.eq.s32.totalorder %s40, 0
    %p378 = por %p376, %p377
    %s380 = sadd.s32 %s379, 1
    %p383 = scmp.eq.s32.totalorder %s34, 5
    %p384 = scmp.ne.s32.totalorder %s379, %s381
    %p385 = scmp.eq.s32.totalorder %s34, 0
    %p386 = por %p384, %p385
    %p387 = scmp.ne.s32.totalorder %s379, %s381
    %p388 = scmp.eq.s32.totalorder %s39, 5
    %p389 = por %p387, %p388
    %p390 = scmp.ne.s32.totalorder %s381, %s382
    %p391 = scmp.eq.s32.totalorder %s39, 0
    %p392 = por %p390, %p391
    %p393 = scmp.ne.s32.totalorder %s381, %s382
    %p394 = scmp.eq.s32.totalorder %s40, 5
    %p395 = por %p393, %p394
    %p397 = scmp.ne.s32.totalorder %s382, %s396
    %p398 = scmp.eq.s32.totalorder %s40, 0
    %p399 = por %p397, %p398
    %s400 = ssub.s32 %s41, %s53
    %p401 = scmp.eq.s32.totalorder %s400, 0
    %s403 = sadd.s32 %s402, 1
    %s404 = scalar_select %p401, %s402, %s403
    %p407 = pneg %p401
    %p408 = scmp.eq.s32.totalorder %s34, 5
    %p409 = por %p407, %p408
    %p410 = scmp.ne.s32.totalorder %s402, %s405
    %p411 = scmp.eq.s32.totalorder %s34, 0
    %p412 = por %p410, %p411
    %p413 = scmp.ne.s32.totalorder %s402, %s405
    %p414 = scmp.eq.s32.totalorder %s39, 5
    %p415 = por %p413, %p414
    %p416 = scmp.ne.s32.totalorder %s405, %s406
    %p417 = scmp.eq.s32.totalorder %s39, 0
    %p418 = por %p416, %p417
    %p419 = scmp.ne.s32.totalorder %s405, %s406
    %p420 = scmp.eq.s32.totalorder %s40, 5
    %p421 = por %p419, %p420
    %p423 = scmp.ne.s32.totalorder %s406, %s422
    %p424 = scmp.eq.s32.totalorder %s40, 0
    %p425 = por %p423, %p424
    %p426 = scmp.le.s32.totalorder 1, %s34
    %p427 = scmp.lt.s32.totalorder %s34, 7
    %p428 = pnand %p426, %p427
    %p429 = pneg %p428
    // Predicated region
    $region9: #{tpu_custom_call.1} parent=5 // pred_check
      _
    $region10: #{tpu_custom_call.1} parent=5 // pred_check_branch
      %431 = sbr.rel (%p428) target = $region12
    $region11: #{tpu_custom_call.1} parent=5 // pred_region
      %s432 = ssub.s32 %s34, 1
      // Predicated region
      $region13: #{tpu_custom_call.1} parent=11 // pred_check
        %p433 = pneg %p119
      $region14: #{tpu_custom_call.1} parent=11 // pred_check_branch
        %435 = sbr.rel (%p433) target = $region16
      $region15: #{tpu_custom_call.1} parent=11 // pred_region
        _
      $region16: #{tpu_custom_call.1} parent=11 // pred_fallthru
        _
      // Predicated region
      $region17: #{tpu_custom_call.1} parent=11 // pred_check
        %p436 = pneg %p140
      $region18: #{tpu_custom_call.1} parent=11 // pred_check_branch
        %438 = sbr.rel (%p436) target = $region20
      $region19: #{tpu_custom_call.1} parent=11 // pred_region
        _
      $region20: #{tpu_custom_call.1} parent=11 // pred_fallthru
        _
      // Predicated region
      $region21: #{tpu_custom_call.1} parent=11 // pred_check
        %p439 = pneg %p161
      $region22: #{tpu_custom_call.1} parent=11 // pred_check_branch
        %441 = sbr.rel (%p439) target = $region24
      $region23: #{tpu_custom_call.1} parent=11 // pred_region
        _
      $region24: #{tpu_custom_call.1} parent=11 // pred_fallthru
        _
      // Predicated region
      $region25: #{tpu_custom_call.1} parent=11 // pred_check
        %p442 = pneg %p182
      $region26: #{tpu_custom_call.1} parent=11 // pred_check_branch
        %444 = sbr.rel (%p442) target = $region28
      $region27: #{tpu_custom_call.1} parent=11 // pred_region
        _
      $region28: #{tpu_custom_call.1} parent=11 // pred_fallthru
        _
      // Predicated region
      $region29: #{tpu_custom_call.1} parent=11 // pred_check
        %p445 = pneg %p203
      $region30: #{tpu_custom_call.1} parent=11 // pred_check_branch
        %447 = sbr.rel (%p445) target = $region32
      $region31: #{tpu_custom_call.1} parent=11 // pred_region
        _
      $region32: #{tpu_custom_call.1} parent=11 // pred_fallthru
        _
      // Predicated region
      $region33: #{tpu_custom_call.1} parent=11 // pred_check
        %p448 = pneg %p224
      $region34: #{tpu_custom_call.1} parent=11 // pred_check_branch
        %450 = sbr.rel (%p448) target = $region36
      $region35: #{tpu_custom_call.1} parent=11 // pred_region
        _
      $region36: #{tpu_custom_call.1} parent=11 // pred_fallthru
        _
      // Predicated region
      $region37: #{tpu_custom_call.1} parent=11 // pred_check
        %p451 = pneg %p245
      $region38: #{tpu_custom_call.1} parent=11 // pred_check_branch
        %453 = sbr.rel (%p451) target = $region40
      $region39: #{tpu_custom_call.1} parent=11 // pred_region
        _
      $region40: #{tpu_custom_call.1} parent=11 // pred_fallthru
        _
      // Predicated region
      $region41: #{tpu_custom_call.1} parent=11 // pred_check
        %p454 = pneg %p266
      $region42: #{tpu_custom_call.1} parent=11 // pred_check_branch
        %456 = sbr.rel (%p454) target = $region44
      $region43: #{tpu_custom_call.1} parent=11 // pred_region
        _
      $region44: #{tpu_custom_call.1} parent=11 // pred_fallthru
        _
      // Predicated region
      $region45: #{tpu_custom_call.1} parent=11 // pred_check
        %p457 = pneg %p287
      $region46: #{tpu_custom_call.1} parent=11 // pred_check_branch
        %459 = sbr.rel (%p457) target = $region48
      $region47: #{tpu_custom_call.1} parent=11 // pred_region
        _
      $region48: #{tpu_custom_call.1} parent=11 // pred_fallthru
        _
      // Predicated region
      $region49: #{tpu_custom_call.1} parent=11 // pred_check
        %p460 = pneg %p308
      $region50: #{tpu_custom_call.1} parent=11 // pred_check_branch
        %462 = sbr.rel (%p460) target = $region52
      $region51: #{tpu_custom_call.1} parent=11 // pred_region
        _
      $region52: #{tpu_custom_call.1} parent=11 // pred_fallthru
        _
      // Predicated region
      $region53: #{tpu_custom_call.1} parent=11 // pred_check
        %p463 = pneg %p329
      $region54: #{tpu_custom_call.1} parent=11 // pred_check_branch
        %465 = sbr.rel (%p463) target = $region56
      $region55: #{tpu_custom_call.1} parent=11 // pred_region
        _
      $region56: #{tpu_custom_call.1} parent=11 // pred_fallthru
        _
      // Predicated region
      $region57: #{tpu_custom_call.1} parent=11 // pred_check
        %p466 = pneg %p350
      $region58: #{tpu_custom_call.1} parent=11 // pred_check_branch
        %468 = sbr.rel (%p466) target = $region60
      $region59: #{tpu_custom_call.1} parent=11 // pred_region
        _
      $region60: #{tpu_custom_call.1} parent=11 // pred_fallthru
        _
      // Predicated region
      $region61: #{tpu_custom_call.1} parent=11 // pred_check
        %p469 = pneg %p371
      $region62: #{tpu_custom_call.1} parent=11 // pred_check_branch
        %471 = sbr.rel (%p469) target = $region64
      $region63: #{tpu_custom_call.1} parent=11 // pred_region
        _
      $region64: #{tpu_custom_call.1} parent=11 // pred_fallthru
        _
      // Predicated region
      $region65: #{tpu_custom_call.1} parent=11 // pred_check
        %p472 = pneg %p392
      $region66: #{tpu_custom_call.1} parent=11 // pred_check_branch
        %474 = sbr.rel (%p472) target = $region68
      $region67: #{tpu_custom_call.1} parent=11 // pred_region
        _
      $region68: #{tpu_custom_call.1} parent=11 // pred_fallthru
        _
    $region12: #{tpu_custom_call.1} parent=5 // pred_fallthru
      _
    %p475 = scmp.lt.s32.totalorder %s34, 6
    // Predicated region
    $region69: #{tpu_custom_call.1} parent=5 // pred_check
      %p476 = pneg %p475
    $region70: #{tpu_custom_call.1} parent=5 // pred_check_branch
      %478 = sbr.rel (%p476) target = $region72
    $region71: #{tpu_custom_call.1} parent=5 // pred_region
      // Predicated region
      $region73: #{tpu_custom_call.1} parent=71 // pred_check
        %p479 = pneg %p66
      $region74: #{tpu_custom_call.1} parent=71 // pred_check_branch
        %481 = sbr.rel (%p479) target = $region76
      $region75: #{tpu_custom_call.1} parent=71 // pred_region
        %p482 = scmp.lt.s32.totalorder %s41, 1
        %s483 = scalar_select %p482, %s41, 1
        %s484 = smul.addr %s483, 2
        %s485 = smul.addr %s484, 8
        %s486 = scalar_lea.vmem %s2, %s485
      $region76: #{tpu_custom_call.1} parent=71 // pred_fallthru
        _
      // Predicated region
      $region77: #{tpu_custom_call.1} parent=71 // pred_check
        %p487 = pneg %p92
      $region78: #{tpu_custom_call.1} parent=71 // pred_check_branch
        %489 = sbr.rel (%p487) target = $region80
      $region79: #{tpu_custom_call.1} parent=71 // pred_region
        %p490 = scmp.lt.s32.totalorder %s41, 1
        %s491 = scalar_select %p490, %s41, 1
        %s492 = smul.addr %s491, 2
        %s493 = smul.addr %s492, 8
        %s494 = scalar_lea.vmem %s3, %s493
      $region80: #{tpu_custom_call.1} parent=71 // pred_fallthru
        _
    $region72: #{tpu_custom_call.1} parent=5 // pred_fallthru
      _
    %p495 = scmp.le.s32.totalorder 1, %s34
    %p496 = scmp.lt.s32.totalorder %s34, 7
    %p497 = pnand %p495, %p496
    %p498 = pneg %p497
    // Predicated region
    $region81: #{tpu_custom_call.1} parent=5 // pred_check
      _
    $region82: #{tpu_custom_call.1} parent=5 // pred_check_branch
      %500 = sbr.rel (%p497) target = $region84
    $region83: #{tpu_custom_call.1} parent=5 // pred_region
      %s501 = ssub.s32 %s34, 1
      %p502 = scmp.lt.s32.totalorder %s43, 1
      %s503 = scalar_select %p502, %s43, 1
      %s504 = smul.addr %s503, 2
      %s505 = smul.addr %s504, 8
      %s506 = scalar_lea.vmem %s2, %s505
      %p507 = pneg %p72
      %p508 = pneg %p69
      %p509 = scmp.lt.s32.totalorder %s43, 1
      %s510 = scalar_select %p509, %s43, 1
      %s511 = smul.addr %s510, 2
      %s512 = smul.addr %s511, 8
      %s513 = scalar_lea.vmem %s3, %s512
      %p514 = pneg %p98
      %p515 = pneg %p95
      %p516 = pneg %p119
      %p517 = pneg %p116
      %p518 = pneg %p140
      %p519 = pneg %p137
      %p520 = pneg %p161
      %p521 = pneg %p158
      %p522 = pneg %p182
      %p523 = pneg %p179
      %p524 = pneg %p203
      %p525 = pneg %p200
      %p526 = pneg %p224
      %p527 = pneg %p221
      %p528 = pneg %p245
      %p529 = pneg %p242
      %p530 = pneg %p266
      %p531 = pneg %p263
      %p532 = pneg %p287
      %p533 = pneg %p284
      %p534 = pneg %p308
      %p535 = pneg %p305
      %p536 = pneg %p329
      %p537 = pneg %p326
      %p538 = pneg %p350
      %p539 = pneg %p347
      %p540 = pneg %p371
      %p541 = pneg %p368
      %p542 = pneg %p392
      %p543 = pneg %p389
      %p544 = pneg %p418
      %p545 = pneg %p415
      %p546 = scmp.lt.s32.totalorder %s43, 1
      %s547 = scalar_select %p546, %s43, 1
      %s548 = smul.addr %s547, 2
      %s549 = smul.addr %s548, 8
      %s550 = scalar_lea.vmem %s18, %s549
      %p551 = scmp.lt.s32.totalorder %s43, 1
      %s552 = scalar_select %p551, %s43, 1
      %s553 = smul.addr %s552, 2
      %s554 = smul.addr %s553, 8
      %s555 = scalar_lea.vmem %s2, %s554
      %p556 = scmp.lt.s32.totalorder %s43, 1
      %s557 = scalar_select %p556, %s43, 1
      %s558 = smul.addr %s557, 2
      %s559 = smul.addr %s558, 8
      %s560 = scalar_lea.vmem %s3, %s559
      %p561 = scmp.lt.s32.totalorder %s43, 1
      %s562 = scalar_select %p561, %s43, 1
      %s563 = smul.addr %s562, 2
      %s564 = smul.addr %s563, 8
      %s565 = scalar_lea.vmem %s18, %s564
      %s566 = sld [smem:[#allocation5 + %s43]]
      %v567 = vlaneseq
      %v568 = vshrl.u32 %v567, 7
      %v569 = vadd.s32 %v568, 8
      %v570 = vstv %s566
      %vm571 = vcmp.lt.s32.totalorder %v568, %v570
      %vm572 = vcmp.lt.s32.totalorder %v569, %v570
      %v573 = vsel %vm571, 1, 0
      %v574 = vsel %vm572, 1, 0
      %v575 = vcvt.s32.f32 %v573
      %v576 = vcvt.s32.f32 %v574
      %p577 = scmp.eq.s32.totalorder %s44, 0
      // Predicated region
      $region85: #{tpu_custom_call.1} parent=83 // pred_check
        %p578 = pneg %p577
      $region86: #{tpu_custom_call.1} parent=83 // pred_check_branch
        %580 = sbr.rel (%p578) target = $region88
      $region87: #{tpu_custom_call.1} parent=83 // pred_region
        %vm581 = vcmask 254976
        %582 = vst.msk [vmem:[#allocation2] sm:$0x3] %vm581, 0.0
        %583 = vst.msk [vmem:[#allocation2 + $0x12] sm:$0x3] %vm581, 0.0
        %v584 = vld [vmem:[%s555] sm:$0xff]
        %v585 = vld [vmem:[%s555 + $0x8] sm:$0xff]
        %v586 = vld [vmem:[%s4] sm:$0xf]
        %v587 = vld [vmem:[%s5] sm:$0x1]
        %v589 = vlaneseq
        %v590 = vshrl.u32 %v589, 7
        %v591 = vsub.s32 0, %v590
        %v592 = vrot.slane %v587, %v591
        %vm594 = vcmask 31744
        %v596 = vsel %vm594, %v584, 0
        %v599 = vsel %vm594, %v585, 0
        %vm601 = vcmask 1043456
        %v603 = vsel %vm601, %v586, 0
        %605 = vmatprep.subr.mxu0 0.0
        %606 = vmatpush1.msra.mxu0 0.0
        %607 = vmatprep.subr.mxu0 0.0
        %608 = vmatpush1.msra.mxu0 0.0
        %609 = vmatprep.subr.mxu0 0.0
        %610 = vmatpush1.msra.mxu0 0.0
        %611 = vmatprep.subr.mxu0 0.0
        %612 = vmatpush1.msra.mxu0 0.0
        %613 = vmatprep.subr.mxu0 0.0
        %614 = vmatpush1.msra.mxu0 0.0
        %615 = vmatprep.subr.mxu0 0.0
        %616 = vmatpush1.msra.mxu0 0.0
        %617 = vmatprep.subr.mxu0 0.0
        %618 = vmatpush1.msra.mxu0 0.0
        %619 = vmatprep.subr.mxu0 0.0
        %620 = vmatpush1.msra.mxu0 0.0
        %621 = vmatprep.subr.mxu0 0.0
        %622 = vmatpush1.msra.mxu0 0.0
        %623 = vmatprep.subr.mxu0 0.0
        %624 = vmatpush1.msra.mxu0 0.0
        %625 = vmatprep.subr.mxu0 0.0
        %626 = vmatpush1.msra.mxu0 0.0
        %627 = vmatprep.subr.mxu0 0.0
        %628 = vmatpush1.msra.mxu0 0.0
        %629 = vmatprep.subr.mxu0 0.0
        %630 = vmatpush1.msra.mxu0 0.0
        %631 = vmatprep.subr.mxu0 0.0
        %632 = vmatpush1.msra.mxu0 0.0
        %633 = vmatprep.subr.mxu0 0.0
        %634 = vmatpush1.msra.mxu0 0.0
        %635 = vmatprep.subr.mxu0 0.0
        %636 = vmatpush1.msra.mxu0 %v603
        %637 = vmatprep.subr.mxu0 0.0
        %638 = vmatpush2.msra.mxu0 0.0
        %639 = vmatprep.subr.mxu0 0.0
        %640 = vmatpush2.msra.mxu0 0.0
        %641 = vmatprep.subr.mxu0 0.0
        %642 = vmatpush2.msra.mxu0 0.0
        %643 = vmatprep.subr.mxu0 0.0
        %644 = vmatpush2.msra.mxu0 0.0
        %645 = vmatprep.subr.mxu0 0.0
        %646 = vmatpush2.msra.mxu0 0.0
        %647 = vmatprep.subr.mxu0 0.0
        %648 = vmatpush2.msra.mxu0 0.0
        %649 = vmatprep.subr.mxu0 0.0
        %650 = vmatpush2.msra.mxu0 0.0
        %651 = vmatprep.subr.mxu0 0.0
        %652 = vmatpush2.msra.mxu0 0.0
        %653 = vmatprep.subr.mxu0 0.0
        %654 = vmatpush2.msra.mxu0 0.0
        %655 = vmatprep.subr.mxu0 0.0
        %656 = vmatpush2.msra.mxu0 0.0
        %657 = vmatprep.subr.mxu0 0.0
        %658 = vmatpush2.msra.mxu0 0.0
        %659 = vmatprep.subr.mxu0 0.0
        %660 = vmatpush2.msra.mxu0 0.0
        %661 = vmatprep.subr.mxu0 0.0
        %662 = vmatpush2.msra.mxu0 0.0
        %663 = vmatprep.subr.mxu0 0.0
        %664 = vmatpush2.msra.mxu0 0.0
        %665 = vmatprep.subr.mxu0 0.0
        %666 = vmatpush2.msra.mxu0 0.0
        %667 = vmatprep.subr.mxu0 0.0
        %668 = vmatpush2.msra.mxu0 0.0
        %669 = vmatprep.mubr.f32.mxu0 0.0
        %670 = vmatmul.mubr.f32.gmra.mxu0 %v596
        %v671 = vpop.f32.mrf.mxu0
        %v672 = vadd.f32 %v592, %v671
        %v673 = vpop.f32.mrf.mxu0
        %674 = vmatprep.mubr.f32.mxu0 0.0
        %675 = vmatmul.mubr.f32.gmra.mxu0 %v599
        %v676 = vpop.f32.mrf.mxu0
        %v677 = vadd.f32 %v592, %v676
        %v678 = vpop.f32.mrf.mxu0
        %679 = vdwg.mxu0
        %v680 = vmul.f32 %v672, %v575
        %v681 = vmul.f32 %v677, %v576
        %vm682 = vcmask 261120
        %683 = vst.msk [vmem:[#allocation2 + $0x2] sm:$0xff] %vm682, %v680
        %684 = vst.msk [vmem:[#allocation2 + $0xa] sm:$0xff] %vm682, %v681
      $region88: #{tpu_custom_call.1} parent=83 // pred_fallthru
        _
      %v685 = vld [vmem:[#allocation2] sm:$0xff]
      %v686 = vld [vmem:[#allocation2 + $0x8] sm:$0xff]
      %v687 = vld [vmem:[#allocation2 + $0x1] sm:$0xff]
      %v688 = vld [vmem:[#allocation2 + $0x9] sm:$0xff]
      %v689 = vld [vmem:[#allocation2 + $0x2] sm:$0xff]
      %v690 = vld [vmem:[#allocation2 + $0xa] sm:$0xff]
      %v691 = vld [vmem:[#allocation2 + $0x3] sm:$0xff]
      %v692 = vld [vmem:[#allocation2 + $0xb] sm:$0xff]
      %v693 = vld [vmem:[#allocation2 + $0x4] sm:$0xff]
      %v694 = vld [vmem:[#allocation2 + $0xc] sm:$0xff]
      %697 = vrot.lane.b32.xlu0 %v687, 32
      %v698 = vpop.permute.xlu0 %697
      %699 = vrot.lane.b32.xlu0 %v688, 32
      %v700 = vpop.permute.xlu0 %699
      %705 = vrot.lane.b32.xlu0 %v689, 64
      %v706 = vpop.permute.xlu0 %705
      %707 = vrot.lane.b32.xlu0 %v690, 64
      %v708 = vpop.permute.xlu0 %707
      %713 = vrot.lane.b32.xlu0 %v691, 96
      %v714 = vpop.permute.xlu0 %713
      %715 = vrot.lane.b32.xlu0 %v692, 96
      %v716 = vpop.permute.xlu0 %715
      %vm719 = vcmask 261120
      %v720 = vsel %vm719, %v685, %v698
      %v721 = vsel %vm719, %v686, %v700
      %vm722 = vcmask 523264
      %v723 = vsel %vm722, %v720, %v706
      %v724 = vsel %vm722, %v721, %v708
      %vm725 = vcmask 785408
      %v726 = vsel %vm725, %v723, %v714
      %v727 = vsel %vm725, %v724, %v716
      %s728 = smul.u32 %s44, 160
      %s729 = scalar_lea.vmem %s6, %s728
      %v730 = vld [vmem:[%s729] sm:$0xff]
      %v731 = vld [vmem:[%s729 + $0x8] sm:$0xff]
      %v732 = vld [vmem:[%s729 + $0x10] sm:$0xff]
      %v733 = vld [vmem:[%s729 + $0x18] sm:$0xff]
      %v734 = vld [vmem:[%s729 + $0x20] sm:$0xff]
      %v735 = vld [vmem:[%s729 + $0x28] sm:$0xff]
      %v736 = vld [vmem:[%s729 + $0x30] sm:$0xff]
      %v737 = vld [vmem:[%s729 + $0x38] sm:$0xff]
      %v738 = vld [vmem:[%s729 + $0x40] sm:$0xff]
      %v739 = vld [vmem:[%s729 + $0x48] sm:$0xff]
      %v740 = vld [vmem:[%s729 + $0x50] sm:$0xff]
      %v741 = vld [vmem:[%s729 + $0x58] sm:$0xff]
      %v742 = vld [vmem:[%s729 + $0x60] sm:$0xff]
      %v743 = vld [vmem:[%s729 + $0x68] sm:$0xff]
      %v744 = vld [vmem:[%s729 + $0x70] sm:$0xff]
      %v745 = vld [vmem:[%s729 + $0x78] sm:$0xff]
      %v746 = vld [vmem:[%s729 + $0x80] sm:$0xff]
      %v747 = vld [vmem:[%s729 + $0x88] sm:$0xff]
      %v748 = vld [vmem:[%s729 + $0x90] sm:$0xff]
      %v749 = vld [vmem:[%s729 + $0x98] sm:$0xff]
      %s750 = scalar_lea.vmem %s7, %s44
      %v751 = vld [vmem:[%s750] sm:$0x1]
      %v753 = vlaneseq
      %v754 = vshrl.u32 %v753, 7
      %v755 = vsub.s32 0, %v754
      %v756 = vrot.slane %v751, %v755
      %v759 = vsel %vm719, %v693, 0
      %v762 = vsel %vm719, %v694, 0
      %764 = vmatprep.subr.mxu0 0.0
      %765 = vmatpush1.msra.mxu0 %v745
      %766 = vmatprep.subr.mxu0 0.0
      %767 = vmatpush1.msra.mxu0 %v744
      %768 = vmatprep.subr.mxu0 0.0
      %769 = vmatpush1.msra.mxu0 %v743
      %770 = vmatprep.subr.mxu0 0.0
      %771 = vmatpush1.msra.mxu0 %v742
      %772 = vmatprep.subr.mxu0 0.0
      %773 = vmatpush1.msra.mxu0 %v741
      %774 = vmatprep.subr.mxu0 0.0
      %775 = vmatpush1.msra.mxu0 %v740
      %776 = vmatprep.subr.mxu0 0.0
      %777 = vmatpush1.msra.mxu0 %v739
      %778 = vmatprep.subr.mxu0 0.0
      %779 = vmatpush1.msra.mxu0 %v738
      %780 = vmatprep.subr.mxu0 0.0
      %781 = vmatpush1.msra.mxu0 %v737
      %782 = vmatprep.subr.mxu0 0.0
      %783 = vmatpush1.msra.mxu0 %v736
      %784 = vmatprep.subr.mxu0 0.0
      %785 = vmatpush1.msra.mxu0 %v735
      %786 = vmatprep.subr.mxu0 0.0
      %787 = vmatpush1.msra.mxu0 %v734
      %788 = vmatprep.subr.mxu0 0.0
      %789 = vmatpush1.msra.mxu0 %v733
      %790 = vmatprep.subr.mxu0 0.0
      %791 = vmatpush1.msra.mxu0 %v732
      %792 = vmatprep.subr.mxu0 0.0
      %793 = vmatpush1.msra.mxu0 %v731
      %794 = vmatprep.subr.mxu0 0.0
      %795 = vmatpush1.msra.mxu0 %v730
      %796 = vmatprep.subr.mxu0 0.0
      %797 = vmatpush2.msra.mxu0 0.0
      %798 = vmatprep.subr.mxu0 0.0
      %799 = vmatpush2.msra.mxu0 0.0
      %800 = vmatprep.subr.mxu0 0.0
      %801 = vmatpush2.msra.mxu0 0.0
      %802 = vmatprep.subr.mxu0 0.0
      %803 = vmatpush2.msra.mxu0 0.0
      %804 = vmatprep.subr.mxu0 0.0
      %805 = vmatpush2.msra.mxu0 0.0
      %806 = vmatprep.subr.mxu0 0.0
      %807 = vmatpush2.msra.mxu0 0.0
      %808 = vmatprep.subr.mxu0 0.0
      %809 = vmatpush2.msra.mxu0 0.0
      %810 = vmatprep.subr.mxu0 0.0
      %811 = vmatpush2.msra.mxu0 0.0
      %812 = vmatprep.subr.mxu0 0.0
      %813 = vmatpush2.msra.mxu0 0.0
      %814 = vmatprep.subr.mxu0 0.0
      %815 = vmatpush2.msra.mxu0 0.0
      %816 = vmatprep.subr.mxu0 0.0
      %817 = vmatpush2.msra.mxu0 0.0
      %818 = vmatprep.subr.mxu0 0.0
      %819 = vmatpush2.msra.mxu0 0.0
      %820 = vmatprep.subr.mxu0 0.0
      %821 = vmatpush2.msra.mxu0 %v749
      %822 = vmatprep.subr.mxu0 0.0
      %823 = vmatpush2.msra.mxu0 %v748
      %824 = vmatprep.subr.mxu0 0.0
      %825 = vmatpush2.msra.mxu0 %v747
      %826 = vmatprep.subr.mxu0 0.0
      %827 = vmatpush2.msra.mxu0 %v746
      %828 = vmatprep.mubr.f32.mxu0 %v759
      %829 = vmatmul.mubr.f32.gmra.mxu0 %v726
      %v830 = vpop.f32.mrf.mxu0
      %v831 = vadd.f32 %v756, %v830
      %v832 = vpop.f32.mrf.mxu0
      %833 = vmatprep.mubr.f32.mxu0 %v762
      %834 = vmatmul.mubr.f32.gmra.mxu0 %v727
      %v835 = vpop.f32.mrf.mxu0
      %v836 = vadd.f32 %v756, %v835
      %v837 = vpop.f32.mrf.mxu0
      %838 = vdwg.mxu0
      %s839 = scalar_lea.vmem %s8, %s728
      %v840 = vld [vmem:[%s839] sm:$0xff]
      %v841 = vld [vmem:[%s839 + $0x8] sm:$0xff]
      %v842 = vld [vmem:[%s839 + $0x10] sm:$0xff]
      %v843 = vld [vmem:[%s839 + $0x18] sm:$0xff]
      %v844 = vld [vmem:[%s839 + $0x20] sm:$0xff]
      %v845 = vld [vmem:[%s839 + $0x28] sm:$0xff]
      %v846 = vld [vmem:[%s839 + $0x30] sm:$0xff]
      %v847 = vld [vmem:[%s839 + $0x38] sm:$0xff]
      %v848 = vld [vmem:[%s839 + $0x40] sm:$0xff]
      %v849 = vld [vmem:[%s839 + $0x48] sm:$0xff]
      %v850 = vld [vmem:[%s839 + $0x50] sm:$0xff]
      %v851 = vld [vmem:[%s839 + $0x58] sm:$0xff]
      %v852 = vld [vmem:[%s839 + $0x60] sm:$0xff]
      %v853 = vld [vmem:[%s839 + $0x68] sm:$0xff]
      %v854 = vld [vmem:[%s839 + $0x70] sm:$0xff]
      %v855 = vld [vmem:[%s839 + $0x78] sm:$0xff]
      %v856 = vld [vmem:[%s839 + $0x80] sm:$0xff]
      %v857 = vld [vmem:[%s839 + $0x88] sm:$0xff]
      %v858 = vld [vmem:[%s839 + $0x90] sm:$0xff]
      %v859 = vld [vmem:[%s839 + $0x98] sm:$0xff]
      %s860 = scalar_lea.vmem %s9, %s44
      %v861 = vld [vmem:[%s860] sm:$0x1]
      %v863 = vlaneseq
      %v864 = vshrl.u32 %v863, 7
      %v865 = vsub.s32 0, %v864
      %v866 = vrot.slane %v861, %v865
      %868 = vmatprep.subr.mxu0 0.0
      %869 = vmatpush1.msra.mxu0 %v855
      %870 = vmatprep.subr.mxu0 0.0
      %871 = vmatpush1.msra.mxu0 %v854
      %872 = vmatprep.subr.mxu0 0.0
      %873 = vmatpush1.msra.mxu0 %v853
      %874 = vmatprep.subr.mxu0 0.0
      %875 = vmatpush1.msra.mxu0 %v852
      %876 = vmatprep.subr.mxu0 0.0
      %877 = vmatpush1.msra.mxu0 %v851
      %878 = vmatprep.subr.mxu0 0.0
      %879 = vmatpush1.msra.mxu0 %v850
      %880 = vmatprep.subr.mxu0 0.0
      %881 = vmatpush1.msra.mxu0 %v849
      %882 = vmatprep.subr.mxu0 0.0
      %883 = vmatpush1.msra.mxu0 %v848
      %884 = vmatprep.subr.mxu0 0.0
      %885 = vmatpush1.msra.mxu0 %v847
      %886 = vmatprep.subr.mxu0 0.0
      %887 = vmatpush1.msra.mxu0 %v846
      %888 = vmatprep.subr.mxu0 0.0
      %889 = vmatpush1.msra.mxu0 %v845
      %890 = vmatprep.subr.mxu0 0.0
      %891 = vmatpush1.msra.mxu0 %v844
      %892 = vmatprep.subr.mxu0 0.0
      %893 = vmatpush1.msra.mxu0 %v843
      %894 = vmatprep.subr.mxu0 0.0
      %895 = vmatpush1.msra.mxu0 %v842
      %896 = vmatprep.subr.mxu0 0.0
      %897 = vmatpush1.msra.mxu0 %v841
      %898 = vmatprep.subr.mxu0 0.0
      %899 = vmatpush1.msra.mxu0 %v840
      %900 = vmatprep.subr.mxu0 0.0
      %901 = vmatpush2.msra.mxu0 0.0
      %902 = vmatprep.subr.mxu0 0.0
      %903 = vmatpush2.msra.mxu0 0.0
      %904 = vmatprep.subr.mxu0 0.0
      %905 = vmatpush2.msra.mxu0 0.0
      %906 = vmatprep.subr.mxu0 0.0
      %907 = vmatpush2.msra.mxu0 0.0
      %908 = vmatprep.subr.mxu0 0.0
      %909 = vmatpush2.msra.mxu0 0.0
      %910 = vmatprep.subr.mxu0 0.0
      %911 = vmatpush2.msra.mxu0 0.0
      %912 = vmatprep.subr.mxu0 0.0
      %913 = vmatpush2.msra.mxu0 0.0
      %914 = vmatprep.subr.mxu0 0.0
      %915 = vmatpush2.msra.mxu0 0.0
      %916 = vmatprep.subr.mxu0 0.0
      %917 = vmatpush2.msra.mxu0 0.0
      %918 = vmatprep.subr.mxu0 0.0
      %919 = vmatpush2.msra.mxu0 0.0
      %920 = vmatprep.subr.mxu0 0.0
      %921 = vmatpush2.msra.mxu0 0.0
      %922 = vmatprep.subr.mxu0 0.0
      %923 = vmatpush2.msra.mxu0 0.0
      %924 = vmatprep.subr.mxu0 0.0
      %925 = vmatpush2.msra.mxu0 %v859
      %926 = vmatprep.subr.mxu0 0.0
      %927 = vmatpush2.msra.mxu0 %v858
      %928 = vmatprep.subr.mxu0 0.0
      %929 = vmatpush2.msra.mxu0 %v857
      %930 = vmatprep.subr.mxu0 0.0
      %931 = vmatpush2.msra.mxu0 %v856
      %932 = vmatprep.mubr.f32.mxu0 %v759
      %933 = vmatmul.mubr.f32.gmra.mxu0 %v726
      %v934 = vpop.f32.mrf.mxu0
      %v935 = vadd.f32 %v866, %v934
      %v936 = vpop.f32.mrf.mxu0
      %937 = vmatprep.mubr.f32.mxu0 %v762
      %938 = vmatmul.mubr.f32.gmra.mxu0 %v727
      %v939 = vpop.f32.mrf.mxu0
      %v940 = vadd.f32 %v866, %v939
      %v941 = vpop.f32.mrf.mxu0
      %942 = vdwg.mxu0
      %v943 = vtanh.pop %v831
      %v944 = vtanh.pop %v836
      %v945 = vxor.u32 %v935, 2147483648
      %v946 = vxor.u32 %v940, 2147483648
      %v947 = vmul.f32 %v945, 1.442695
      %v948 = vpow.pop %v947
      %v949 = vmul.f32 %v946, 1.442695
      %v950 = vpow.pop %v949
      %v951 = vadd.f32 %v948, 1.0
      %v952 = vadd.f32 %v950, 1.0
      %v953 = vrcp.pop %v951
      %v954 = vmul.f32 1.0, %v953
      %v955 = vrcp.pop %v952
      %v956 = vmul.f32 1.0, %v955
      %v957 = vmul.f32 %v943, %v954
      %v958 = vmul.f32 %v944, %v956
      %s959 = smul.u32 %s44, 32
      %s960 = scalar_lea.vmem %s12, %s959
      %v961 = vld [vmem:[%s960] sm:$0xff]
      %v962 = vld [vmem:[%s960 + $0x8] sm:$0xff]
      %v963 = vld [vmem:[%s960 + $0x10] sm:$0xff]
      %v964 = vld [vmem:[%s960 + $0x18] sm:$0xff]
      %s965 = scalar_lea.vmem %s13, %s44
      %v966 = vld [vmem:[%s965] sm:$0x1]
      %v968 = vlaneseq
      %v969 = vshrl.u32 %v968, 7
      %v970 = vsub.s32 0, %v969
      %v971 = vrot.slane %v966, %v970
      %v974 = vsel %vm719, %v957, 0
      %v977 = vsel %vm719, %v958, 0
      %979 = vmatprep.subr.mxu0 0.0
      %980 = vmatpush1.msra.mxu0 0.0
      %981 = vmatprep.subr.mxu0 0.0
      %982 = vmatpush1.msra.mxu0 0.0
      %983 = vmatprep.subr.mxu0 0.0
      %984 = vmatpush1.msra.mxu0 0.0
      %985 = vmatprep.subr.mxu0 0.0
      %986 = vmatpush1.msra.mxu0 0.0
      %987 = vmatprep.subr.mxu0 0.0
      %988 = vmatpush1.msra.mxu0 0.0
      %989 = vmatprep.subr.mxu0 0.0
      %990 = vmatpush1.msra.mxu0 0.0
      %991 = vmatprep.subr.mxu0 0.0
      %992 = vmatpush1.msra.mxu0 0.0
      %993 = vmatprep.subr.mxu0 0.0
      %994 = vmatpush1.msra.mxu0 0.0
      %995 = vmatprep.subr.mxu0 0.0
      %996 = vmatpush1.msra.mxu0 0.0
      %997 = vmatprep.subr.mxu0 0.0
      %998 = vmatpush1.msra.mxu0 0.0
      %999 = vmatprep.subr.mxu0 0.0
      %1000 = vmatpush1.msra.mxu0 0.0
      %1001 = vmatprep.subr.mxu0 0.0
      %1002 = vmatpush1.msra.mxu0 0.0
      %1003 = vmatprep.subr.mxu0 0.0
      %1004 = vmatpush1.msra.mxu0 %v964
      %1005 = vmatprep.subr.mxu0 0.0
      %1006 = vmatpush1.msra.mxu0 %v963
      %1007 = vmatprep.subr.mxu0 0.0
      %1008 = vmatpush1.msra.mxu0 %v962
      %1009 = vmatprep.subr.mxu0 0.0
      %1010 = vmatpush1.msra.mxu0 %v961
      %1011 = vmatprep.subr.mxu0 0.0
      %1012 = vmatpush2.msra.mxu0 0.0
      %1013 = vmatprep.subr.mxu0 0.0
      %1014 = vmatpush2.msra.mxu0 0.0
      %1015 = vmatprep.subr.mxu0 0.0
      %1016 = vmatpush2.msra.mxu0 0.0
      %1017 = vmatprep.subr.mxu0 0.0
      %1018 = vmatpush2.msra.mxu0 0.0
      %1019 = vmatprep.subr.mxu0 0.0
      %1020 = vmatpush2.msra.mxu0 0.0
      %1021 = vmatprep.subr.mxu0 0.0
      %1022 = vmatpush2.msra.mxu0 0.0
      %1023 = vmatprep.subr.mxu0 0.0
      %1024 = vmatpush2.msra.mxu0 0.0
      %1025 = vmatprep.subr.mxu0 0.0
      %1026 = vmatpush2.msra.mxu0 0.0
      %1027 = vmatprep.subr.mxu0 0.0
      %1028 = vmatpush2.msra.mxu0 0.0
      %1029 = vmatprep.subr.mxu0 0.0
      %1030 = vmatpush2.msra.mxu0 0.0
      %1031 = vmatprep.subr.mxu0 0.0
      %1032 = vmatpush2.msra.mxu0 0.0
      %1033 = vmatprep.subr.mxu0 0.0
      %1034 = vmatpush2.msra.mxu0 0.0
      %1035 = vmatprep.subr.mxu0 0.0
      %1036 = vmatpush2.msra.mxu0 0.0
      %1037 = vmatprep.subr.mxu0 0.0
      %1038 = vmatpush2.msra.mxu0 0.0
      %1039 = vmatprep.subr.mxu0 0.0
      %1040 = vmatpush2.msra.mxu0 0.0
      %1041 = vmatprep.subr.mxu0 0.0
      %1042 = vmatpush2.msra.mxu0 0.0
      %1043 = vmatprep.mubr.f32.mxu0 0.0
      %1044 = vmatmul.mubr.f32.gmra.mxu0 %v974
      %v1045 = vpop.f32.mrf.mxu0
      %v1046 = vadd.f32 %v971, %v1045
      %v1047 = vpop.f32.mrf.mxu0
      %1048 = vmatprep.mubr.f32.mxu0 0.0
      %1049 = vmatmul.mubr.f32.gmra.mxu0 %v977
      %v1050 = vpop.f32.mrf.mxu0
      %v1051 = vadd.f32 %v971, %v1050
      %v1052 = vpop.f32.mrf.mxu0
      %1053 = vdwg.mxu0
      // Predicated region
      $region89: #{tpu_custom_call.1} parent=83 // pred_check
        %p1054 = pneg %p577
      $region90: #{tpu_custom_call.1} parent=83 // pred_check_branch
        %1056 = sbr.rel (%p1054) target = $region92
      $region91: #{tpu_custom_call.1} parent=83 // pred_region
        %1057 = vst.msk [vmem:[#allocation3] sm:$0xff] %vm719, %v1046
        %1058 = vst.msk [vmem:[#allocation3 + $0x8] sm:$0xff] %vm719, %v1051
      $region92: #{tpu_custom_call.1} parent=83 // pred_fallthru
        _
      %p1059 = scmp.gt.s32.totalorder %s44, 0
      // Predicated region
      $region93: #{tpu_custom_call.1} parent=83 // pred_check
        %p1060 = pneg %p1059
      $region94: #{tpu_custom_call.1} parent=83 // pred_check_branch
        %1062 = sbr.rel (%p1060) target = $region96
      $region95: #{tpu_custom_call.1} parent=83 // pred_region
        %v1063 = vld [vmem:[#allocation3] sm:$0xff]
        %v1064 = vld [vmem:[#allocation3 + $0x8] sm:$0xff]
        %v1065 = vadd.f32 %v1063, %v1046
        %v1066 = vadd.f32 %v1064, %v1051
        %1067 = vst.msk [vmem:[#allocation3] sm:$0xff] %vm719, %v1065
        %1068 = vst.msk [vmem:[#allocation3 + $0x8] sm:$0xff] %vm719, %v1066
      $region96: #{tpu_custom_call.1} parent=83 // pred_fallthru
        _
      %p1069 = scmp.lt.s32.totalorder %s44, 2
      // Predicated region
      $region97: #{tpu_custom_call.1} parent=83 // pred_check
        %p1070 = pneg %p1069
      $region98: #{tpu_custom_call.1} parent=83 // pred_check_branch
        %1072 = sbr.rel (%p1070) target = $region100
      $region99: #{tpu_custom_call.1} parent=83 // pred_region
        %s1073 = scalar_lea.vmem %s10, %s959
        %v1074 = vld [vmem:[%s1073] sm:$0xff]
        %v1075 = vld [vmem:[%s1073 + $0x8] sm:$0xff]
        %v1076 = vld [vmem:[%s1073 + $0x10] sm:$0xff]
        %v1077 = vld [vmem:[%s1073 + $0x18] sm:$0xff]
        %s1078 = scalar_lea.vmem %s11, %s44
        %v1079 = vld [vmem:[%s1078] sm:$0x1]
        %v1081 = vlaneseq
        %v1082 = vshrl.u32 %v1081, 7
        %v1083 = vsub.s32 0, %v1082
        %v1084 = vrot.slane %v1079, %v1083
        %1086 = vmatprep.subr.mxu0 0.0
        %1087 = vmatpush1.msra.mxu0 0.0
        %1088 = vmatprep.subr.mxu0 0.0
        %1089 = vmatpush1.msra.mxu0 0.0
        %1090 = vmatprep.subr.mxu0 0.0
        %1091 = vmatpush1.msra.mxu0 0.0
        %1092 = vmatprep.subr.mxu0 0.0
        %1093 = vmatpush1.msra.mxu0 0.0
        %1094 = vmatprep.subr.mxu0 0.0
        %1095 = vmatpush1.msra.mxu0 0.0
        %1096 = vmatprep.subr.mxu0 0.0
        %1097 = vmatpush1.msra.mxu0 0.0
        %1098 = vmatprep.subr.mxu0 0.0
        %1099 = vmatpush1.msra.mxu0 0.0
        %1100 = vmatprep.subr.mxu0 0.0
        %1101 = vmatpush1.msra.mxu0 0.0
        %1102 = vmatprep.subr.mxu0 0.0
        %1103 = vmatpush1.msra.mxu0 0.0
        %1104 = vmatprep.subr.mxu0 0.0
        %1105 = vmatpush1.msra.mxu0 0.0
        %1106 = vmatprep.subr.mxu0 0.0
        %1107 = vmatpush1.msra.mxu0 0.0
        %1108 = vmatprep.subr.mxu0 0.0
        %1109 = vmatpush1.msra.mxu0 0.0
        %1110 = vmatprep.subr.mxu0 0.0
        %1111 = vmatpush1.msra.mxu0 %v1077
        %1112 = vmatprep.subr.mxu0 0.0
        %1113 = vmatpush1.msra.mxu0 %v1076
        %1114 = vmatprep.subr.mxu0 0.0
        %1115 = vmatpush1.msra.mxu0 %v1075
        %1116 = vmatprep.subr.mxu0 0.0
        %1117 = vmatpush1.msra.mxu0 %v1074
        %1118 = vmatprep.subr.mxu0 0.0
        %1119 = vmatpush2.msra.mxu0 0.0
        %1120 = vmatprep.subr.mxu0 0.0
        %1121 = vmatpush2.msra.mxu0 0.0
        %1122 = vmatprep.subr.mxu0 0.0
        %1123 = vmatpush2.msra.mxu0 0.0
        %1124 = vmatprep.subr.mxu0 0.0
        %1125 = vmatpush2.msra.mxu0 0.0
        %1126 = vmatprep.subr.mxu0 0.0
        %1127 = vmatpush2.msra.mxu0 0.0
        %1128 = vmatprep.subr.mxu0 0.0
        %1129 = vmatpush2.msra.mxu0 0.0
        %1130 = vmatprep.subr.mxu0 0.0
        %1131 = vmatpush2.msra.mxu0 0.0
        %1132 = vmatprep.subr.mxu0 0.0
        %1133 = vmatpush2.msra.mxu0 0.0
        %1134 = vmatprep.subr.mxu0 0.0
        %1135 = vmatpush2.msra.mxu0 0.0
        %1136 = vmatprep.subr.mxu0 0.0
        %1137 = vmatpush2.msra.mxu0 0.0
        %1138 = vmatprep.subr.mxu0 0.0
        %1139 = vmatpush2.msra.mxu0 0.0
        %1140 = vmatprep.subr.mxu0 0.0
        %1141 = vmatpush2.msra.mxu0 0.0
        %1142 = vmatprep.subr.mxu0 0.0
        %1143 = vmatpush2.msra.mxu0 0.0
        %1144 = vmatprep.subr.mxu0 0.0
        %1145 = vmatpush2.msra.mxu0 0.0
        %1146 = vmatprep.subr.mxu0 0.0
        %1147 = vmatpush2.msra.mxu0 0.0
        %1148 = vmatprep.subr.mxu0 0.0
        %1149 = vmatpush2.msra.mxu0 0.0
        %1150 = vmatprep.mubr.f32.mxu0 0.0
        %1151 = vmatmul.mubr.f32.gmra.mxu0 %v974
        %v1152 = vpop.f32.mrf.mxu0
        %v1153 = vadd.f32 %v1084, %v1152
        %v1154 = vpop.f32.mrf.mxu0
        %1155 = vmatprep.mubr.f32.mxu0 0.0
        %1156 = vmatmul.mubr.f32.gmra.mxu0 %v977
        %v1157 = vpop.f32.mrf.mxu0
        %v1158 = vadd.f32 %v1084, %v1157
        %v1159 = vpop.f32.mrf.mxu0
        %1160 = vdwg.mxu0
        %v1161 = vld [vmem:[#allocation2 + $0x2] sm:$0xff]
        %v1162 = vld [vmem:[#allocation2 + $0xa] sm:$0xff]
        %v1163 = vadd.f32 %v1161, %v1153
        %v1164 = vadd.f32 %v1162, %v1158
        %v1165 = vmul.f32 %v1163, %v575
        %v1166 = vmul.f32 %v1164, %v576
        %1167 = vst.msk [vmem:[#allocation2 + $0x2] sm:$0xff] %vm719, %v1165
        %1168 = vst.msk [vmem:[#allocation2 + $0xa] sm:$0xff] %vm719, %v1166
      $region100: #{tpu_custom_call.1} parent=83 // pred_fallthru
        _
      %p1169 = scmp.eq.s32.totalorder %s44, 2
      // Predicated region
      $region101: #{tpu_custom_call.1} parent=83 // pred_check
        %p1170 = pneg %p1169
      $region102: #{tpu_custom_call.1} parent=83 // pred_check_branch
        %1172 = sbr.rel (%p1170) target = $region104
      $region103: #{tpu_custom_call.1} parent=83 // pred_region
        %v1173 = vld [vmem:[#allocation3] sm:$0xff]
        %v1174 = vld [vmem:[#allocation3 + $0x8] sm:$0xff]
        %v1175 = vmul.f32 %v1173, %v575
        %v1176 = vmul.f32 %v1174, %v576
        %v1177 = vld [vmem:[%s14] sm:$0xff]
        %v1178 = vld [vmem:[%s14 + $0x8] sm:$0xff]
        %v1179 = vld [vmem:[%s14 + $0x10] sm:$0xff]
        %v1180 = vld [vmem:[%s14 + $0x18] sm:$0xff]
        %v1181 = vld [vmem:[%s15] sm:$0x1]
        %v1183 = vlaneseq
        %v1184 = vshrl.u32 %v1183, 7
        %v1185 = vsub.s32 0, %v1184
        %v1186 = vrot.slane %v1181, %v1185
        %v1189 = vsel %vm719, %v1175, 0
        %v1192 = vsel %vm719, %v1176, 0
        %1194 = vmatprep.subr.mxu0 0.0
        %1195 = vmatpush1.msra.mxu0 0.0
        %1196 = vmatprep.subr.mxu0 0.0
        %1197 = vmatpush1.msra.mxu0 0.0
        %1198 = vmatprep.subr.mxu0 0.0
        %1199 = vmatpush1.msra.mxu0 0.0
        %1200 = vmatprep.subr.mxu0 0.0
        %1201 = vmatpush1.msra.mxu0 0.0
        %1202 = vmatprep.subr.mxu0 0.0
        %1203 = vmatpush1.msra.mxu0 0.0
        %1204 = vmatprep.subr.mxu0 0.0
        %1205 = vmatpush1.msra.mxu0 0.0
        %1206 = vmatprep.subr.mxu0 0.0
        %1207 = vmatpush1.msra.mxu0 0.0
        %1208 = vmatprep.subr.mxu0 0.0
        %1209 = vmatpush1.msra.mxu0 0.0
        %1210 = vmatprep.subr.mxu0 0.0
        %1211 = vmatpush1.msra.mxu0 0.0
        %1212 = vmatprep.subr.mxu0 0.0
        %1213 = vmatpush1.msra.mxu0 0.0
        %1214 = vmatprep.subr.mxu0 0.0
        %1215 = vmatpush1.msra.mxu0 0.0
        %1216 = vmatprep.subr.mxu0 0.0
        %1217 = vmatpush1.msra.mxu0 0.0
        %1218 = vmatprep.subr.mxu0 0.0
        %1219 = vmatpush1.msra.mxu0 %v1180
        %1220 = vmatprep.subr.mxu0 0.0
        %1221 = vmatpush1.msra.mxu0 %v1179
        %1222 = vmatprep.subr.mxu0 0.0
        %1223 = vmatpush1.msra.mxu0 %v1178
        %1224 = vmatprep.subr.mxu0 0.0
        %1225 = vmatpush1.msra.mxu0 %v1177
        %1226 = vmatprep.subr.mxu0 0.0
        %1227 = vmatpush2.msra.mxu0 0.0
        %1228 = vmatprep.subr.mxu0 0.0
        %1229 = vmatpush2.msra.mxu0 0.0
        %1230 = vmatprep.subr.mxu0 0.0
        %1231 = vmatpush2.msra.mxu0 0.0
        %1232 = vmatprep.subr.mxu0 0.0
        %1233 = vmatpush2.msra.mxu0 0.0
        %1234 = vmatprep.subr.mxu0 0.0
        %1235 = vmatpush2.msra.mxu0 0.0
        %1236 = vmatprep.subr.mxu0 0.0
        %1237 = vmatpush2.msra.mxu0 0.0
        %1238 = vmatprep.subr.mxu0 0.0
        %1239 = vmatpush2.msra.mxu0 0.0
        %1240 = vmatprep.subr.mxu0 0.0
        %1241 = vmatpush2.msra.mxu0 0.0
        %1242 = vmatprep.subr.mxu0 0.0
        %1243 = vmatpush2.msra.mxu0 0.0
        %1244 = vmatprep.subr.mxu0 0.0
        %1245 = vmatpush2.msra.mxu0 0.0
        %1246 = vmatprep.subr.mxu0 0.0
        %1247 = vmatpush2.msra.mxu0 0.0
        %1248 = vmatprep.subr.mxu0 0.0
        %1249 = vmatpush2.msra.mxu0 0.0
        %1250 = vmatprep.subr.mxu0 0.0
        %1251 = vmatpush2.msra.mxu0 0.0
        %1252 = vmatprep.subr.mxu0 0.0
        %1253 = vmatpush2.msra.mxu0 0.0
        %1254 = vmatprep.subr.mxu0 0.0
        %1255 = vmatpush2.msra.mxu0 0.0
        %1256 = vmatprep.subr.mxu0 0.0
        %1257 = vmatpush2.msra.mxu0 0.0
        %1258 = vmatprep.mubr.f32.mxu0 0.0
        %1259 = vmatmul.mubr.f32.gmra.mxu0 %v1189
        %v1260 = vpop.f32.mrf.mxu0
        %v1261 = vadd.f32 %v1186, %v1260
        %v1262 = vpop.f32.mrf.mxu0
        %1263 = vmatprep.mubr.f32.mxu0 0.0
        %1264 = vmatmul.mubr.f32.gmra.mxu0 %v1192
        %v1265 = vpop.f32.mrf.mxu0
        %v1266 = vadd.f32 %v1186, %v1265
        %v1267 = vpop.f32.mrf.mxu0
        %1268 = vdwg.mxu0
        %v1269 = vmul.f32 %v1261, %v575
        %v1270 = vmul.f32 %v1266, %v576
        %v1271 = vld [vmem:[%s16] sm:$0xff]
        %v1272 = vld [vmem:[%s16 + $0x8] sm:$0xff]
        %v1273 = vld [vmem:[%s16 + $0x10] sm:$0xff]
        %v1274 = vld [vmem:[%s16 + $0x18] sm:$0xff]
        %v1275 = vld [vmem:[%s17] sm:$0x1]
        %v1277 = vlaneseq
        %v1278 = vshrl.u32 %v1277, 7
        %v1279 = vsub.s32 0, %v1278
        %v1280 = vrot.slane %v1275, %v1279
        %1282 = vmatprep.subr.mxu0 0.0
        %1283 = vmatpush1.msra.mxu0 0.0
        %1284 = vmatprep.subr.mxu0 0.0
        %1285 = vmatpush1.msra.mxu0 0.0
        %1286 = vmatprep.subr.mxu0 0.0
        %1287 = vmatpush1.msra.mxu0 0.0
        %1288 = vmatprep.subr.mxu0 0.0
        %1289 = vmatpush1.msra.mxu0 0.0
        %1290 = vmatprep.subr.mxu0 0.0
        %1291 = vmatpush1.msra.mxu0 0.0
        %1292 = vmatprep.subr.mxu0 0.0
        %1293 = vmatpush1.msra.mxu0 0.0
        %1294 = vmatprep.subr.mxu0 0.0
        %1295 = vmatpush1.msra.mxu0 0.0
        %1296 = vmatprep.subr.mxu0 0.0
        %1297 = vmatpush1.msra.mxu0 0.0
        %1298 = vmatprep.subr.mxu0 0.0
        %1299 = vmatpush1.msra.mxu0 0.0
        %1300 = vmatprep.subr.mxu0 0.0
        %1301 = vmatpush1.msra.mxu0 0.0
        %1302 = vmatprep.subr.mxu0 0.0
        %1303 = vmatpush1.msra.mxu0 0.0
        %1304 = vmatprep.subr.mxu0 0.0
        %1305 = vmatpush1.msra.mxu0 0.0
        %1306 = vmatprep.subr.mxu0 0.0
        %1307 = vmatpush1.msra.mxu0 %v1274
        %1308 = vmatprep.subr.mxu0 0.0
        %1309 = vmatpush1.msra.mxu0 %v1273
        %1310 = vmatprep.subr.mxu0 0.0
        %1311 = vmatpush1.msra.mxu0 %v1272
        %1312 = vmatprep.subr.mxu0 0.0
        %1313 = vmatpush1.msra.mxu0 %v1271
        %1314 = vmatprep.subr.mxu0 0.0
        %1315 = vmatpush2.msra.mxu0 0.0
        %1316 = vmatprep.subr.mxu0 0.0
        %1317 = vmatpush2.msra.mxu0 0.0
        %1318 = vmatprep.subr.mxu0 0.0
        %1319 = vmatpush2.msra.mxu0 0.0
        %1320 = vmatprep.subr.mxu0 0.0
        %1321 = vmatpush2.msra.mxu0 0.0
        %1322 = vmatprep.subr.mxu0 0.0
        %1323 = vmatpush2.msra.mxu0 0.0
        %1324 = vmatprep.subr.mxu0 0.0
        %1325 = vmatpush2.msra.mxu0 0.0
        %1326 = vmatprep.subr.mxu0 0.0
        %1327 = vmatpush2.msra.mxu0 0.0
        %1328 = vmatprep.subr.mxu0 0.0
        %1329 = vmatpush2.msra.mxu0 0.0
        %1330 = vmatprep.subr.mxu0 0.0
        %1331 = vmatpush2.msra.mxu0 0.0
        %1332 = vmatprep.subr.mxu0 0.0
        %1333 = vmatpush2.msra.mxu0 0.0
        %1334 = vmatprep.subr.mxu0 0.0
        %1335 = vmatpush2.msra.mxu0 0.0
        %1336 = vmatprep.subr.mxu0 0.0
        %1337 = vmatpush2.msra.mxu0 0.0
        %1338 = vmatprep.subr.mxu0 0.0
        %1339 = vmatpush2.msra.mxu0 0.0
        %1340 = vmatprep.subr.mxu0 0.0
        %1341 = vmatpush2.msra.mxu0 0.0
        %1342 = vmatprep.subr.mxu0 0.0
        %1343 = vmatpush2.msra.mxu0 0.0
        %1344 = vmatprep.subr.mxu0 0.0
        %1345 = vmatpush2.msra.mxu0 0.0
        %1346 = vmatprep.mubr.f32.mxu0 0.0
        %1347 = vmatmul.mubr.f32.gmra.mxu0 %v1189
        %v1348 = vpop.f32.mrf.mxu0
        %v1349 = vadd.f32 %v1280, %v1348
        %v1350 = vpop.f32.mrf.mxu0
        %1351 = vmatprep.mubr.f32.mxu0 0.0
        %1352 = vmatmul.mubr.f32.gmra.mxu0 %v1192
        %v1353 = vpop.f32.mrf.mxu0
        %v1354 = vadd.f32 %v1280, %v1353
        %v1355 = vpop.f32.mrf.mxu0
        %1356 = vdwg.mxu0
        %v1357 = vmul.f32 %v1349, %v575
        %v1358 = vmul.f32 %v1354, %v576
        %v1359 = vld [vmem:[%s560] sm:$0xff]
        %v1360 = vld [vmem:[%s560 + $0x8] sm:$0xff]
        %v1361 = vmul.f32 %v1357, 1.442695
        %v1362 = vpow.pop %v1361
        %v1363 = vmul.f32 %v1358, 1.442695
        %v1364 = vpow.pop %v1363
        %v1365 = vmul.f32 %v1359, %v1362
        %v1366 = vmul.f32 %v1360, %v1364
        %v1367 = vadd.f32 %v1269, %v1365
        %v1368 = vadd.f32 %v1270, %v1366
        %v1369 = vmul.f32 %v1367, %v575
        %v1370 = vmul.f32 %v1368, %v576
        %1373 = vrot.lane.b32.xlu0 %v1269, 4
        %v1374 = vpop.permute.xlu0 %1373
        %1375 = vrot.lane.b32.xlu0 %v1270, 4
        %v1376 = vpop.permute.xlu0 %1375
        %1381 = vrot.lane.b32.xlu0 %v1357, 8
        %v1382 = vpop.permute.xlu0 %1381
        %1383 = vrot.lane.b32.xlu0 %v1358, 8
        %v1384 = vpop.permute.xlu0 %1383
        %vm1387 = vcmask 31744
        %v1388 = vsel %vm1387, %v1369, %v1374
        %v1389 = vsel %vm1387, %v1370, %v1376
        %vm1390 = vcmask 64512
        %v1391 = vsel %vm1390, %v1388, %v1382
        %v1392 = vsel %vm1390, %v1389, %v1384
        %vm1393 = vcmask 97280
        %1394 = vst.msk [vmem:[%s565] sm:$0xff] %vm1393, %v1391
        %1395 = vst.msk [vmem:[%s565 + $0x8] sm:$0xff] %vm1393, %v1392
      $region104: #{tpu_custom_call.1} parent=83 // pred_fallthru
        _
      %p1396 = scmp.lt.s32.totalorder %s43, 1
      %s1397 = scalar_select %p1396, %s43, 1
      %s1398 = smul.addr %s1397, 2
      %s1399 = smul.addr %s1398, 8
      %s1400 = scalar_lea.vmem %s18, %s1399
      // Predicated region
      $region105: #{tpu_custom_call.1} parent=83 // pred_check
        %p1401 = pneg %p415
      $region106: #{tpu_custom_call.1} parent=83 // pred_check_branch
        %1403 = sbr.rel (%p1401) target = $region108
      $region107: #{tpu_custom_call.1} parent=83 // pred_region
        _
      $region108: #{tpu_custom_call.1} parent=83 // pred_fallthru
        _
    $region84: #{tpu_custom_call.1} parent=5 // pred_fallthru
      _
    %p1404 = scmp.le.s32.totalorder 2, %s34
    // Predicated region
    $region109: #{tpu_custom_call.1} parent=5 // pred_check
      %p1405 = pneg %p1404
    $region110: #{tpu_custom_call.1} parent=5 // pred_check_branch
      %1407 = sbr.rel (%p1405) target = $region112
    $region111: #{tpu_custom_call.1} parent=5 // pred_region
      %s1408 = ssub.s32 %s34, 2
      // Predicated region
      $region113: #{tpu_custom_call.1} parent=111 // pred_check
        %p1409 = pneg %p421
      $region114: #{tpu_custom_call.1} parent=111 // pred_check_branch
        %1411 = sbr.rel (%p1409) target = $region116
      $region115: #{tpu_custom_call.1} parent=111 // pred_region
        %p1412 = scmp.lt.s32.totalorder %s45, 1
        %s1413 = scalar_select %p1412, %s45, 1
        %s1414 = smul.addr %s1413, 2
        %s1415 = smul.addr %s1414, 8
        %s1416 = scalar_lea.vmem %s18, %s1415
      $region116: #{tpu_custom_call.1} parent=111 // pred_fallthru
        _
    $region112: #{tpu_custom_call.1} parent=5 // pred_fallthru
      _
  $region6: #{tpu_custom_call.1} parent=0 // loop_footer
    %s38 = sadd.s32 1, %s34
  $region7: #{tpu_custom_call.1} parent=0 // loop_footer_branch
    %33 = sbr.rel target = $region3
  $region8: #{tpu_custom_call.1} parent=0 // loop_exit
    _

</llo_original>
